<compile_context>
chip_gen: v7x
topology: tpu7x:2x2x1
jax: 0.10.0
libtpu: 0.0.40
codegen_flags: <defaults>
</compile_context>

<pallas_src>
import functools

import numpy as np

import jax
import jax.numpy as jnp
from jax.experimental import pallas as pl
from jax.experimental.pallas import tpu as pltpu


# ---------------------------------------------------------------------------
# Pallas kernels
# ---------------------------------------------------------------------------
def _conv_bn_relu_kernel(w_ref, p_ref, prm_ref, o_ref):
    """Channel-major fused conv: (relu(W @ P + bias)) * bn_scale + bn_shift.

    w_ref:   (Cout, K)    bf16 conv weights (rows = output channels)
    p_ref:   (K, tm)      bf16 im2col patches (cols = output spatial positions)
    prm_ref: (3, Cout, 1) f32 packed [bias, bn_scale, bn_shift]
    o_ref:   (Cout, tm)   lane-dense output block (bf16)
    """
    acc = jnp.dot(w_ref[...], p_ref[...], preferred_element_type=jnp.float32)
    y = jnp.maximum(acc + prm_ref[0], 0.0)                  # Conv3d bias + ReLU
    o_ref[...] = (y * prm_ref[1] + prm_ref[2]).astype(o_ref.dtype)


def _conv3_pool_mlp_kernel(w3_ref, p_ref, prm_ref, pool_ref,
                           w0_ref, w1_ref, w2_ref, fcb_ref, o_ref):
    """conv2+ReLU+BN, AdaptiveAvgPool3d(1), Flatten, (Linear,ReLU)x2, Linear.

    w3_ref:  (64, 864) bf16     p_ref: (864, N*S) bf16     prm_ref: (3, 64, 1) f32
    pool_ref:(N*S, N) f32 block-averaging matrix
    w0/w1/w2: bf16 FC weights   fcb_ref: (3, 128, 1) f32 packed [b0, b1, pad(b2)]
    o_ref:   (1, N) f32
    """
    acc = jnp.dot(w3_ref[...], p_ref[...], preferred_element_type=jnp.float32)
    y = jnp.maximum(acc + prm_ref[0], 0.0) * prm_ref[1] + prm_ref[2]       # (64, N*S)
    # AdaptiveAvgPool3d(1) as a matmul with a block-averaging matrix -> (64, N)
    feat = jnp.dot(y, pool_ref[...], preferred_element_type=jnp.float32)
    h = jnp.dot(w0_ref[...], feat.astype(w0_ref.dtype),
                preferred_element_type=jnp.float32)
    h = jnp.maximum(h + fcb_ref[0], 0.0)
    h = jnp.dot(w1_ref[...], h.astype(w1_ref.dtype),
                preferred_element_type=jnp.float32)
    h = jnp.maximum(h + fcb_ref[1], 0.0)
    out = jnp.dot(w2_ref[...], h.astype(w2_ref.dtype),
                  preferred_element_type=jnp.float32)
    b2 = fcb_ref[2][0:1, :]                                                # (1, 1)
    o_ref[...] = (out + b2).astype(o_ref.dtype)


# ---------------------------------------------------------------------------
# Tiling helpers
# ---------------------------------------------------------------------------
@functools.lru_cache(maxsize=1)
def _has_megacore():
    """Only v7x has 2 TensorCores per chip; on v5e/v6e a grid split is just a serial
    loop with ~0.35 us/step overhead, so we only split on v7x."""
    try:
        return "v7" in jax.devices()[0].device_kind.lower()
    except Exception:  # be conservative if the backend can't be queried
        return False


def _pick_tile_m(m, k, cout, *, split, vmem_budget_bytes=24 << 20):
    """Output-column tile for the conv matmul.

    Full M (grid=(1,)) unless `split` (v7x megacore) asks for a 2-way lane-dense
    M-split.  In either case cap the tile so the double-buffered bf16 blocks stay
    well inside the scoped VMEM limit (matters on v7x's 64 MiB when N / volume grow).
    """
    tm = m // 2 if (split and m % 256 == 0) else m

    def blk_bytes(t):
        # 2x (double buffer) * (weight + patches + prm + output) per grid step
        return 2 * (cout * k * 2 + k * t * 2 + 3 * cout * 4 + cout * t * 2)

    while tm > 128 and tm % 2 == 0 and blk_bytes(tm) > vmem_budget_bytes:
        tm //= 2
    return tm


# ---------------------------------------------------------------------------
# Pallas wrappers
# ---------------------------------------------------------------------------
def conv_bn_relu(wmat, patches, prm, *, tile_m, out_dtype=jnp.bfloat16):
    """wmat: (Cout, K) bf16, patches: (K, M) bf16, prm: (3, Cout, 1) f32 -> (Cout, M)."""
    cout, k = wmat.shape
    _, m = patches.shape
    assert m % tile_m == 0
    return pl.pallas_call(
        _conv_bn_relu_kernel,
        out_shape=jax.ShapeDtypeStruct((cout, m), out_dtype),
        grid=(m // tile_m,),
        in_specs=[
            pl.BlockSpec((cout, k), lambda j: (0, 0)),
            pl.BlockSpec((k, tile_m), lambda j: (0, j)),
            pl.BlockSpec((3, cout, 1), lambda j: (0, 0, 0)),
        ],
        out_specs=pl.BlockSpec((cout, tile_m), lambda j: (0, j)),
        compiler_params=pltpu.CompilerParams(
            dimension_semantics=("parallel",),
            vmem_limit_bytes=32 << 20),
    )(wmat, patches, prm)


def conv3_pool_decode(w3mat, patches, prm, pool, w0, w1, w2, fcb):
    """Fused last conv + ReLU + BN + avg-pool + MLP decoder. Returns (1, N) f32."""
    n = pool.shape[1]
    args = (w3mat, patches, prm, pool, w0, w1, w2, fcb)

    def _full_spec(a):
        nd = a.ndim
        return pl.BlockSpec(a.shape, lambda *_: (0,) * nd)

    return pl.pallas_call(
        _conv3_pool_mlp_kernel,
        out_shape=jax.ShapeDtypeStruct((1, n), jnp.float32),
        grid=(1,),
        in_specs=[_full_spec(a) for a in args],
        out_specs=pl.BlockSpec((1, n), lambda i: (0, 0)),
        compiler_params=pltpu.CompilerParams(
            dimension_semantics=("arbitrary",),
            vmem_limit_bytes=32 << 20),
    )(*args)


# ---------------------------------------------------------------------------
# Plain-JAX glue: channel-major im2col for Conv3d(k=3, stride=2, padding=1)
# (fused by XLA under jit; runs on bf16 activations so it moves half the bytes)
# ---------------------------------------------------------------------------
def im2col_cm(act, n, c, d, h, w, k=3, stride=2, pad=1):
    """act: (C, N*D*H*W) -> (C*k^3, N*Do*Ho*Wo) patches, plus (Do, Ho, Wo).

    Patch-row ordering is (cin, kd, kh, kw), matching torch_w.reshape(Cout, Cin*27).
    """
    do = (d + 2 * pad - k) // stride + 1
    ho = (h + 2 * pad - k) // stride + 1
    wo = (w + 2 * pad - k) // stride + 1
    a = act.reshape(c, n, d, h, w)
    a = jnp.pad(a, ((0, 0), (0, 0), (pad, pad), (pad, pad), (pad, pad)))
    slabs = []
    for kd in range(k):
        for kh in range(k):
            for kw in range(k):
                slabs.append(a[:, :,
                               kd:kd + do * stride:stride,
                               kh:kh + ho * stride:stride,
                               kw:kw + wo * stride:stride])
    p = jnp.stack(slabs, axis=1)                  # (C, 27, N, Do, Ho, Wo)
    return p.reshape(c * k * k * k, n * do * ho * wo), (do, ho, wo)


# ---------------------------------------------------------------------------
# Parameter construction (deterministic, PyTorch-shaped)
# ---------------------------------------------------------------------------
def init_params(key):
    filters = [16, 32, 64]
    params = {}
    in_c = 1
    keys = jax.random.split(key, 32)
    ki = 0
    for li, out_c in enumerate(filters):
        params[f"conv{li}_w"] = 0.1 * jax.random.normal(
            keys[ki], (out_c, in_c, 3, 3, 3), jnp.float32); ki += 1
        params[f"conv{li}_b"] = 0.1 * jax.random.normal(
            keys[ki], (out_c,), jnp.float32); ki += 1
        params[f"bn{li}_gamma"] = 1.0 + 0.1 * jax.random.normal(
            keys[ki], (out_c,), jnp.float32); ki += 1
        params[f"bn{li}_beta"] = 0.1 * jax.random.normal(
            keys[ki], (out_c,), jnp.float32); ki += 1
        params[f"bn{li}_mean"] = 0.1 * jax.random.normal(
            keys[ki], (out_c,), jnp.float32); ki += 1
        params[f"bn{li}_var"] = 0.5 + jnp.abs(jax.random.normal(
            keys[ki], (out_c,), jnp.float32)); ki += 1
        in_c = out_c
    dims = [(64, 128), (128, 128), (128, 1)]
    for li, (fin, fout) in enumerate(dims):
        # PyTorch Linear stores weight as (out_features, in_features)
        params[f"fc{li}_w"] = 0.1 * jax.random.normal(
            keys[ki], (fout, fin), jnp.float32); ki += 1
        params[f"fc{li}_b"] = 0.1 * jax.random.normal(
            keys[ki], (fout,), jnp.float32); ki += 1
    return params


# ---------------------------------------------------------------------------
# Full forward pass (Pallas)
# ---------------------------------------------------------------------------
def ink_detector_forward(x, params, bn_eps=1e-5):
    """x: (N, 1, D, H, W) float32. Returns (N, 1) float32."""
    n = x.shape[0]
    d, h, w = x.shape[2:]
    cin = 1
    # channel-major (C, N*D*H*W), bf16 for all matmul operands / inter-layer traffic
    act = x.astype(jnp.bfloat16).reshape(cin, n * d * h * w)
    split_conv0 = _has_megacore()

    def packed_prm(li, cout):
        scale = params[f"bn{li}_gamma"] / jnp.sqrt(params[f"bn{li}_var"] + bn_eps)
        shift = params[f"bn{li}_beta"] - params[f"bn{li}_mean"] * scale
        return jnp.stack([params[f"conv{li}_b"], scale, shift]).reshape(3, cout, 1)

    # conv0 / conv1: fused Conv3d + bias + ReLU + BN as channel-major matmuls.
    for li in range(2):
        cw = params[f"conv{li}_w"]                  # (Cout, Cin, 3, 3, 3)
        cout = cw.shape[0]
        patches, (d, h, w) = im2col_cm(act, n, cin, d, h, w)
        m = patches.shape[1]
        k = cin * 27
        tile_m = _pick_tile_m(m, k, cout, split=(split_conv0 and li == 0))
        act = conv_bn_relu(cw.reshape(cout, k).astype(jnp.bfloat16),
                           patches, packed_prm(li, cout),
                           tile_m=tile_m, out_dtype=jnp.bfloat16)
        cin = cout

    # conv2 + ReLU + BN + AdaptiveAvgPool3d(1) + Flatten + MLP decoder, one kernel.
    cw = params["conv2_w"]
    cout = cw.shape[0]
    patches, (d, h, w) = im2col_cm(act, n, cin, d, h, w)
    s = d * h * w
    pool = jnp.kron(jnp.eye(n, dtype=jnp.float32),
                    jnp.full((s, 1), 1.0 / s, jnp.float32))          # (N*S, N)
    fcb = jnp.stack([params["fc0_b"], params["fc1_b"],
                     jnp.pad(params["fc2_b"], (0, 127))]).reshape(3, 128, 1)
    out = conv3_pool_decode(
        cw.reshape(cout, cin * 27).astype(jnp.bfloat16), patches,
        packed_prm(2, cout), pool,
        params["fc0_w"].astype(jnp.bfloat16),
        params["fc1_w"].astype(jnp.bfloat16),
        params["fc2_w"].astype(jnp.bfloat16), fcb)                   # (1, N)
    return out.reshape(n, 1)


# ---------------------------------------------------------------------------
# Pure-JAX f32 reference (same inference-mode BN semantics), for validation
# ---------------------------------------------------------------------------
def ink_detector_reference(x, params, bn_eps=1e-5):
    act = x
    for li in range(3):
        cw = params[f"conv{li}_w"]
        act = jax.lax.conv_general_dilated(
            act, cw, window_strides=(2, 2, 2), padding=((1, 1),) * 3,
            dimension_numbers=("NCDHW", "OIDHW", "NCDHW"))
        act = act + params[f"conv{li}_b"].reshape(1, -1, 1, 1, 1)
        act = jnp.maximum(act, 0.0)
        scale = params[f"bn{li}_gamma"] / jnp.sqrt(params[f"bn{li}_var"] + bn_eps)
        shift = params[f"bn{li}_beta"] - params[f"bn{li}_mean"] * scale
        act = act * scale.reshape(1, -1, 1, 1, 1) + shift.reshape(1, -1, 1, 1, 1)
    feat = act.mean(axis=(2, 3, 4))                                  # (N, 64)
    h = jnp.maximum(feat @ params["fc0_w"].T + params["fc0_b"], 0.0)
    h = jnp.maximum(h @ params["fc1_w"].T + params["fc1_b"], 0.0)
    return h @ params["fc2_w"].T + params["fc2_b"]


# ---------------------------------------------------------------------------
if __name__ == "__main__":
    key = jax.random.PRNGKey(0)
    pkey, xkey = jax.random.split(key)
    params = init_params(pkey)
    # N=2, C=1, D=H=W=16  (NCDHW, matches nn.Conv3d input convention)
    x = jax.random.normal(xkey, (2, 1, 16, 16, 16), jnp.float32)

    fwd = jax.jit(ink_detector_forward)
    out = jax.block_until_ready(fwd(x, params))
    assert out.shape == (2, 1) and out.dtype == jnp.float32

    ref = jax.block_until_ready(jax.jit(ink_detector_reference)(x, params))
    # bf16 matmul operands (f32 accumulation) -> loose tolerance vs f32 reference
    np.testing.assert_allclose(np.asarray(out), np.asarray(ref), rtol=1e-1, atol=1e-1)
    print("KERNEL_OK")
</pallas_src>

<mosaic_0001>
module attributes {stable_mosaic.version = 11 : i64} {
  func.func @_conv_bn_relu_kernel(%arg0: i32, %arg1: memref<16x27xbf16, #tpu.memory_space<vmem>>, %arg2: memref<27x1024xbf16, #tpu.memory_space<vmem>>, %arg3: memref<3x16x1xf32, #tpu.memory_space<vmem>>, %arg4: memref<16x1024xbf16, #tpu.memory_space<vmem>>) attributes {dimension_semantics = [#tpu.dimension_semantics<parallel>], iteration_bounds = array<i64: 1>, scalar_prefetch = 0 : i64, scratch_operands = 0 : i64, tpu.core_type = #tpu.core_type<tc>, window_params = [{pipeline_mode = #tpu.pipeline_mode<synchronous>, transform_indices = @transform_0, window_bounds = array<i64: 16, 27>}, {transform_indices = @transform_1, window_bounds = array<i64: 27, 1024>}, {pipeline_mode = #tpu.pipeline_mode<synchronous>, transform_indices = @transform_2, window_bounds = array<i64: 3, 16, 1>}, {transform_indices = @transform_3, window_bounds = array<i64: 16, 1024>}]} {
    %c0 = arith.constant 0 : index
    %c0_0 = arith.constant 0 : index
    %0 = vector.load %arg1[%c0, %c0_0] : memref<16x27xbf16, #tpu.memory_space<vmem>>, vector<16x27xbf16>
    %c0_1 = arith.constant 0 : index
    %c0_2 = arith.constant 0 : index
    %1 = vector.load %arg2[%c0_1, %c0_2] : memref<27x1024xbf16, #tpu.memory_space<vmem>>, vector<27x1024xbf16>
    %cst = arith.constant dense<0.000000e+00> : vector<16x1024xf32>
    %2 = tpu.matmul %0, %1, %cst {dimension_numbers = #tpu.dot_dimension_numbers<[1], [0], [0], [1], [0, 0, 1, 1], [], []>} : vector<16x27xbf16>, vector<27x1024xbf16>, vector<16x1024xf32> -> vector<16x1024xf32>
    %c0_3 = arith.constant 0 : index
    %c0_4 = arith.constant 0 : index
    %c0_5 = arith.constant 0 : index
    %3 = vector.load %arg3[%c0_3, %c0_4, %c0_5] : memref<3x16x1xf32, #tpu.memory_space<vmem>>, vector<1x16x1xf32>
    %4 = vector.shape_cast %3 : vector<1x16x1xf32> to vector<16x1xf32>
    %5 = vector.broadcast %4 : vector<16x1xf32> to vector<16x1024xf32>
    %6 = arith.addf %2, %5 : vector<16x1024xf32>
    %cst_6 = arith.constant 0.000000e+00 : f32
    %7 = vector.broadcast %cst_6 : f32 to vector<16x1024xf32>
    %8 = arith.maximumf %6, %7 : vector<16x1024xf32>
    %c1 = arith.constant 1 : index
    %c0_7 = arith.constant 0 : index
    %c0_8 = arith.constant 0 : index
    %9 = vector.load %arg3[%c1, %c0_7, %c0_8] : memref<3x16x1xf32, #tpu.memory_space<vmem>>, vector<1x16x1xf32>
    %10 = vector.shape_cast %9 : vector<1x16x1xf32> to vector<16x1xf32>
    %11 = vector.broadcast %10 : vector<16x1xf32> to vector<16x1024xf32>
    %12 = arith.mulf %8, %11 : vector<16x1024xf32>
    %c2 = arith.constant 2 : index
    %c0_9 = arith.constant 0 : index
    %c0_10 = arith.constant 0 : index
    %13 = vector.load %arg3[%c2, %c0_9, %c0_10] : memref<3x16x1xf32, #tpu.memory_space<vmem>>, vector<1x16x1xf32>
    %14 = vector.shape_cast %13 : vector<1x16x1xf32> to vector<16x1xf32>
    %15 = vector.broadcast %14 : vector<16x1xf32> to vector<16x1024xf32>
    %16 = arith.addf %12, %15 : vector<16x1024xf32>
    %17 = arith.truncf %16 : vector<16x1024xf32> to vector<16x1024xbf16>
    %c0_11 = arith.constant 0 : index
    %c0_12 = arith.constant 0 : index
    %18 = vector.load %arg4[%c0_11, %c0_12] : memref<16x1024xbf16, #tpu.memory_space<vmem>>, vector<16x1024xbf16>
    tpu.vector_store %arg4[%c0_11, %c0_12], %17 {strides = array<i32>} : memref<16x1024xbf16, #tpu.memory_space<vmem>>, vector<16x1024xbf16>,
    return
  }
  func.func @transform_0(%arg0: i32) -> (i32, i32) {
    %c0_i32 = arith.constant 0 : i32
    %c0_i32_0 = arith.constant 0 : i32
    %c0_i32_1 = arith.constant 0 : i32
    return %c0_i32, %c0_i32_0 : i32, i32
  }
  func.func @transform_1(%arg0: i32) -> (i32, i32) {
    %c0_i32 = arith.constant 0 : i32
    %c0_i32_0 = arith.constant 0 : i32
    return %c0_i32, %arg0 : i32, i32
  }
  func.func @transform_2(%arg0: i32) -> (i32, i32, i32) {
    %c0_i32 = arith.constant 0 : i32
    %c0_i32_0 = arith.constant 0 : i32
    %c0_i32_1 = arith.constant 0 : i32
    %c0_i32_2 = arith.constant 0 : i32
    return %c0_i32, %c0_i32_0, %c0_i32_1 : i32, i32, i32
  }
  func.func @transform_3(%arg0: i32) -> (i32, i32) {
    %c0_i32 = arith.constant 0 : i32
    %c0_i32_0 = arith.constant 0 : i32
    return %c0_i32, %arg0 : i32, i32
  }
}

module attributes {stable_mosaic.version = 11 : i64} {
  func.func @_conv_bn_relu_kernel(%arg0: i32, %arg1: memref<32x432xbf16, #tpu.memory_space<vmem>>, %arg2: memref<432x128xbf16, #tpu.memory_space<vmem>>, %arg3: memref<3x32x1xf32, #tpu.memory_space<vmem>>, %arg4: memref<32x128xbf16, #tpu.memory_space<vmem>>) attributes {dimension_semantics = [#tpu.dimension_semantics<parallel>], iteration_bounds = array<i64: 1>, scalar_prefetch = 0 : i64, scratch_operands = 0 : i64, tpu.core_type = #tpu.core_type<tc>, window_params = [{pipeline_mode = #tpu.pipeline_mode<synchronous>, transform_indices = @transform_0, window_bounds = array<i64: 32, 432>}, {transform_indices = @transform_1, window_bounds = array<i64: 432, 128>}, {pipeline_mode = #tpu.pipeline_mode<synchronous>, transform_indices = @transform_2, window_bounds = array<i64: 3, 32, 1>}, {transform_indices = @transform_3, window_bounds = array<i64: 32, 128>}]} {
    %c0 = arith.constant 0 : index
    %c0_0 = arith.constant 0 : index
    %0 = vector.load %arg1[%c0, %c0_0] : memref<32x432xbf16, #tpu.memory_space<vmem>>, vector<32x432xbf16>
    %c0_1 = arith.constant 0 : index
    %c0_2 = arith.constant 0 : index
    %1 = vector.load %arg2[%c0_1, %c0_2] : memref<432x128xbf16, #tpu.memory_space<vmem>>, vector<432x128xbf16>
    %cst = arith.constant dense<0.000000e+00> : vector<32x128xf32>
    %2 = tpu.matmul %0, %1, %cst {dimension_numbers = #tpu.dot_dimension_numbers<[1], [0], [0], [1], [0, 0, 1, 1], [], []>} : vector<32x432xbf16>, vector<432x128xbf16>, vector<32x128xf32> -> vector<32x128xf32>
    %c0_3 = arith.constant 0 : index
    %c0_4 = arith.constant 0 : index
    %c0_5 = arith.constant 0 : index
    %3 = vector.load %arg3[%c0_3, %c0_4, %c0_5] : memref<3x32x1xf32, #tpu.memory_space<vmem>>, vector<1x32x1xf32>
    %4 = vector.shape_cast %3 : vector<1x32x1xf32> to vector<32x1xf32>
    %5 = vector.broadcast %4 : vector<32x1xf32> to vector<32x128xf32>
    %6 = arith.addf %2, %5 : vector<32x128xf32>
    %cst_6 = arith.constant 0.000000e+00 : f32
    %7 = vector.broadcast %cst_6 : f32 to vector<32x128xf32>
    %8 = arith.maximumf %6, %7 : vector<32x128xf32>
    %c1 = arith.constant 1 : index
    %c0_7 = arith.constant 0 : index
    %c0_8 = arith.constant 0 : index
    %9 = vector.load %arg3[%c1, %c0_7, %c0_8] : memref<3x32x1xf32, #tpu.memory_space<vmem>>, vector<1x32x1xf32>
    %10 = vector.shape_cast %9 : vector<1x32x1xf32> to vector<32x1xf32>
    %11 = vector.broadcast %10 : vector<32x1xf32> to vector<32x128xf32>
    %12 = arith.mulf %8, %11 : vector<32x128xf32>
    %c2 = arith.constant 2 : index
    %c0_9 = arith.constant 0 : index
    %c0_10 = arith.constant 0 : index
    %13 = vector.load %arg3[%c2, %c0_9, %c0_10] : memref<3x32x1xf32, #tpu.memory_space<vmem>>, vector<1x32x1xf32>
    %14 = vector.shape_cast %13 : vector<1x32x1xf32> to vector<32x1xf32>
    %15 = vector.broadcast %14 : vector<32x1xf32> to vector<32x128xf32>
    %16 = arith.addf %12, %15 : vector<32x128xf32>
    %17 = arith.truncf %16 : vector<32x128xf32> to vector<32x128xbf16>
    %c0_11 = arith.constant 0 : index
    %c0_12 = arith.constant 0 : index
    %18 = vector.load %arg4[%c0_11, %c0_12] : memref<32x128xbf16, #tpu.memory_space<vmem>>, vector<32x128xbf16>
    tpu.vector_store %arg4[%c0_11, %c0_12], %17 {strides = array<i32>} : memref<32x128xbf16, #tpu.memory_space<vmem>>, vector<32x128xbf16>,
    return
  }
  func.func @transform_0(%arg0: i32) -> (i32, i32) {
    %c0_i32 = arith.constant 0 : i32
    %c0_i32_0 = arith.constant 0 : i32
    %c0_i32_1 = arith.constant 0 : i32
    return %c0_i32, %c0_i32_0 : i32, i32
  }
  func.func @transform_1(%arg0: i32) -> (i32, i32) {
    %c0_i32 = arith.constant 0 : i32
    %c0_i32_0 = arith.constant 0 : i32
    return %c0_i32, %arg0 : i32, i32
  }
  func.func @transform_2(%arg0: i32) -> (i32, i32, i32) {
    %c0_i32 = arith.constant 0 : i32
    %c0_i32_0 = arith.constant 0 : i32
    %c0_i32_1 = arith.constant 0 : i32
    %c0_i32_2 = arith.constant 0 : i32
    return %c0_i32, %c0_i32_0, %c0_i32_1 : i32, i32, i32
  }
  func.func @transform_3(%arg0: i32) -> (i32, i32) {
    %c0_i32 = arith.constant 0 : i32
    %c0_i32_0 = arith.constant 0 : i32
    return %c0_i32, %arg0 : i32, i32
  }
}

module attributes {stable_mosaic.version = 11 : i64} {
  func.func @_conv3_pool_mlp_kernel(%arg0: i32, %arg1: memref<64x864xbf16, #tpu.memory_space<vmem>>, %arg2: memref<864x16xbf16, #tpu.memory_space<vmem>>, %arg3: memref<3x64x1xf32, #tpu.memory_space<vmem>>, %arg4: memref<16x2xf32, #tpu.memory_space<vmem>>, %arg5: memref<128x64xbf16, #tpu.memory_space<vmem>>, %arg6: memref<128x128xbf16, #tpu.memory_space<vmem>>, %arg7: memref<1x128xbf16, #tpu.memory_space<vmem>>, %arg8: memref<3x128x1xf32, #tpu.memory_space<vmem>>, %arg9: memref<1x2xf32, #tpu.memory_space<vmem>>) attributes {dimension_semantics = [#tpu.dimension_semantics<arbitrary>], iteration_bounds = array<i64: 1>, scalar_prefetch = 0 : i64, scratch_operands = 0 : i64, tpu.core_type = #tpu.core_type<tc>, window_params = [{pipeline_mode = #tpu.pipeline_mode<synchronous>, transform_indices = @transform_0, window_bounds = array<i64: 64, 864>}, {pipeline_mode = #tpu.pipeline_mode<synchronous>, transform_indices = @transform_1, window_bounds = array<i64: 864, 16>}, {pipeline_mode = #tpu.pipeline_mode<synchronous>, transform_indices = @transform_2, window_bounds = array<i64: 3, 64, 1>}, {pipeline_mode = #tpu.pipeline_mode<synchronous>, transform_indices = @transform_3, window_bounds = array<i64: 16, 2>}, {pipeline_mode = #tpu.pipeline_mode<synchronous>, transform_indices = @transform_4, window_bounds = array<i64: 128, 64>}, {pipeline_mode = #tpu.pipeline_mode<synchronous>, transform_indices = @transform_5, window_bounds = array<i64: 128, 128>}, {pipeline_mode = #tpu.pipeline_mode<synchronous>, transform_indices = @transform_6, window_bounds = array<i64: 1, 128>}, {pipeline_mode = #tpu.pipeline_mode<synchronous>, transform_indices = @transform_7, window_bounds = array<i64: 3, 128, 1>}, {pipeline_mode = #tpu.pipeline_mode<synchronous>, transform_indices = @transform_8, window_bounds = array<i64: 1, 2>}]} {
    %c0 = arith.constant 0 : index
    %c0_0 = arith.constant 0 : index
    %0 = vector.load %arg1[%c0, %c0_0] : memref<64x864xbf16, #tpu.memory_space<vmem>>, vector<64x864xbf16>
    %c0_1 = arith.constant 0 : index
    %c0_2 = arith.constant 0 : index
    %1 = vector.load %arg2[%c0_1, %c0_2] : memref<864x16xbf16, #tpu.memory_space<vmem>>, vector<864x16xbf16>
    %cst = arith.constant dense<0.000000e+00> : vector<64x16xf32>
    %2 = tpu.matmul %0, %1, %cst {dimension_numbers = #tpu.dot_dimension_numbers<[1], [0], [0], [1], [0, 0, 1, 1], [], []>} : vector<64x864xbf16>, vector<864x16xbf16>, vector<64x16xf32> -> vector<64x16xf32>
    %c0_3 = arith.constant 0 : index
    %c0_4 = arith.constant 0 : index
    %c0_5 = arith.constant 0 : index
    %3 = vector.load %arg3[%c0_3, %c0_4, %c0_5] : memref<3x64x1xf32, #tpu.memory_space<vmem>>, vector<1x64x1xf32>
    %4 = vector.shape_cast %3 : vector<1x64x1xf32> to vector<64x1xf32>
    %5 = vector.broadcast %4 : vector<64x1xf32> to vector<64x16xf32>
    %6 = arith.addf %2, %5 : vector<64x16xf32>
    %cst_6 = arith.constant 0.000000e+00 : f32
    %7 = vector.broadcast %cst_6 : f32 to vector<64x16xf32>
    %8 = arith.maximumf %6, %7 : vector<64x16xf32>
    %c1 = arith.constant 1 : index
    %c0_7 = arith.constant 0 : index
    %c0_8 = arith.constant 0 : index
    %9 = vector.load %arg3[%c1, %c0_7, %c0_8] : memref<3x64x1xf32, #tpu.memory_space<vmem>>, vector<1x64x1xf32>
    %10 = vector.shape_cast %9 : vector<1x64x1xf32> to vector<64x1xf32>
    %11 = vector.broadcast %10 : vector<64x1xf32> to vector<64x16xf32>
    %12 = arith.mulf %8, %11 : vector<64x16xf32>
    %c2 = arith.constant 2 : index
    %c0_9 = arith.constant 0 : index
    %c0_10 = arith.constant 0 : index
    %13 = vector.load %arg3[%c2, %c0_9, %c0_10] : memref<3x64x1xf32, #tpu.memory_space<vmem>>, vector<1x64x1xf32>
    %14 = vector.shape_cast %13 : vector<1x64x1xf32> to vector<64x1xf32>
    %15 = vector.broadcast %14 : vector<64x1xf32> to vector<64x16xf32>
    %16 = arith.addf %12, %15 : vector<64x16xf32>
    %c0_11 = arith.constant 0 : index
    %c0_12 = arith.constant 0 : index
    %17 = vector.load %arg4[%c0_11, %c0_12] : memref<16x2xf32, #tpu.memory_space<vmem>>, vector<16x2xf32>
    %cst_13 = arith.constant dense<0.000000e+00> : vector<64x2xf32>
    %18 = tpu.matmul %16, %17, %cst_13 {dimension_numbers = #tpu.dot_dimension_numbers<[1], [0], [0], [1], [0, 0, 1, 1], [], []>} : vector<64x16xf32>, vector<16x2xf32>, vector<64x2xf32> -> vector<64x2xf32>
    %c0_14 = arith.constant 0 : index
    %c0_15 = arith.constant 0 : index
    %19 = vector.load %arg5[%c0_14, %c0_15] : memref<128x64xbf16, #tpu.memory_space<vmem>>, vector<128x64xbf16>
    %20 = arith.truncf %18 : vector<64x2xf32> to vector<64x2xbf16>
    %cst_16 = arith.constant dense<0.000000e+00> : vector<128x2xf32>
    %21 = tpu.matmul %19, %20, %cst_16 {dimension_numbers = #tpu.dot_dimension_numbers<[1], [0], [0], [1], [0, 0, 1, 1], [], []>} : vector<128x64xbf16>, vector<64x2xbf16>, vector<128x2xf32> -> vector<128x2xf32>
    %c0_17 = arith.constant 0 : index
    %c0_18 = arith.constant 0 : index
    %c0_19 = arith.constant 0 : index
    %22 = vector.load %arg8[%c0_17, %c0_18, %c0_19] : memref<3x128x1xf32, #tpu.memory_space<vmem>>, vector<1x128x1xf32>
    %23 = vector.shape_cast %22 : vector<1x128x1xf32> to vector<128x1xf32>
    %24 = vector.broadcast %23 : vector<128x1xf32> to vector<128x2xf32>
    %25 = arith.addf %21, %24 : vector<128x2xf32>
    %cst_20 = arith.constant 0.000000e+00 : f32
    %26 = vector.broadcast %cst_20 : f32 to vector<128x2xf32>
    %27 = arith.maximumf %25, %26 : vector<128x2xf32>
    %c0_21 = arith.constant 0 : index
    %c0_22 = arith.constant 0 : index
    %28 = vector.load %arg6[%c0_21, %c0_22] : memref<128x128xbf16, #tpu.memory_space<vmem>>, vector<128x128xbf16>
    %29 = arith.truncf %27 : vector<128x2xf32> to vector<128x2xbf16>
    %cst_23 = arith.constant dense<0.000000e+00> : vector<128x2xf32>
    %30 = tpu.matmul %28, %29, %cst_23 {dimension_numbers = #tpu.dot_dimension_numbers<[1], [0], [0], [1], [0, 0, 1, 1], [], []>} : vector<128x128xbf16>, vector<128x2xbf16>, vector<128x2xf32> -> vector<128x2xf32>
    %c1_24 = arith.constant 1 : index
    %c0_25 = arith.constant 0 : index
    %c0_26 = arith.constant 0 : index
    %31 = vector.load %arg8[%c1_24, %c0_25, %c0_26] : memref<3x128x1xf32, #tpu.memory_space<vmem>>, vector<1x128x1xf32>
    %32 = vector.shape_cast %31 : vector<1x128x1xf32> to vector<128x1xf32>
    %33 = vector.broadcast %32 : vector<128x1xf32> to vector<128x2xf32>
    %34 = arith.addf %30, %33 : vector<128x2xf32>
    %cst_27 = arith.constant 0.000000e+00 : f32
    %35 = vector.broadcast %cst_27 : f32 to vector<128x2xf32>
    %36 = arith.maximumf %34, %35 : vector<128x2xf32>
    %c0_28 = arith.constant 0 : index
    %c0_29 = arith.constant 0 : index
    %37 = vector.load %arg7[%c0_28, %c0_29] : memref<1x128xbf16, #tpu.memory_space<vmem>>, vector<1x128xbf16>
    %38 = arith.truncf %36 : vector<128x2xf32> to vector<128x2xbf16>
    %cst_30 = arith.constant dense<0.000000e+00> : vector<1x2xf32>
    %39 = tpu.matmul %37, %38, %cst_30 {dimension_numbers = #tpu.dot_dimension_numbers<[1], [0], [0], [1], [0, 0, 1, 1], [], []>} : vector<1x128xbf16>, vector<128x2xbf16>, vector<1x2xf32> -> vector<1x2xf32>
    %c2_31 = arith.constant 2 : index
    %c0_32 = arith.constant 0 : index
    %c0_33 = arith.constant 0 : index
    %40 = vector.load %arg8[%c2_31, %c0_32, %c0_33] : memref<3x128x1xf32, #tpu.memory_space<vmem>>, vector<1x128x1xf32>
    %41 = vector.shape_cast %40 : vector<1x128x1xf32> to vector<128x1xf32>
    %42 = vector.extract_strided_slice %41 {offsets = [0, 0], sizes = [1, 1], strides = [1, 1]} : vector<128x1xf32> to vector<1x1xf32>
    %43 = vector.broadcast %42 : vector<1x1xf32> to vector<1x2xf32>
    %44 = arith.addf %39, %43 : vector<1x2xf32>
    %c0_34 = arith.constant 0 : index
    %c0_35 = arith.constant 0 : index
    %45 = vector.load %arg9[%c0_34, %c0_35] : memref<1x2xf32, #tpu.memory_space<vmem>>, vector<1x2xf32>
    tpu.vector_store %arg9[%c0_34, %c0_35], %44 {strides = array<i32>} : memref<1x2xf32, #tpu.memory_space<vmem>>, vector<1x2xf32>,
    return
  }
  func.func @transform_0(%arg0: i32) -> (i32, i32) {
    %c0_i32 = arith.constant 0 : i32
    %c0_i32_0 = arith.constant 0 : i32
    %c0_i32_1 = arith.constant 0 : i32
    return %c0_i32, %c0_i32_0 : i32, i32
  }
  func.func @transform_1(%arg0: i32) -> (i32, i32) {
    %c0_i32 = arith.constant 0 : i32
    %c0_i32_0 = arith.constant 0 : i32
    %c0_i32_1 = arith.constant 0 : i32
    return %c0_i32, %c0_i32_0 : i32, i32
  }
  func.func @transform_2(%arg0: i32) -> (i32, i32, i32) {
    %c0_i32 = arith.constant 0 : i32
    %c0_i32_0 = arith.constant 0 : i32
    %c0_i32_1 = arith.constant 0 : i32
    %c0_i32_2 = arith.constant 0 : i32
    return %c0_i32, %c0_i32_0, %c0_i32_1 : i32, i32, i32
  }
  func.func @transform_3(%arg0: i32) -> (i32, i32) {
    %c0_i32 = arith.constant 0 : i32
    %c0_i32_0 = arith.constant 0 : i32
    %c0_i32_1 = arith.constant 0 : i32
    return %c0_i32, %c0_i32_0 : i32, i32
  }
  func.func @transform_4(%arg0: i32) -> (i32, i32) {
    %c0_i32 = arith.constant 0 : i32
    %c0_i32_0 = arith.constant 0 : i32
    %c0_i32_1 = arith.constant 0 : i32
    return %c0_i32, %c0_i32_0 : i32, i32
  }
  func.func @transform_5(%arg0: i32) -> (i32, i32) {
    %c0_i32 = arith.constant 0 : i32
    %c0_i32_0 = arith.constant 0 : i32
    %c0_i32_1 = arith.constant 0 : i32
    return %c0_i32, %c0_i32_0 : i32, i32
  }
  func.func @transform_6(%arg0: i32) -> (i32, i32) {
    %c0_i32 = arith.constant 0 : i32
    %c0_i32_0 = arith.constant 0 : i32
    %c0_i32_1 = arith.constant 0 : i32
    return %c0_i32, %c0_i32_0 : i32, i32
  }
  func.func @transform_7(%arg0: i32) -> (i32, i32, i32) {
    %c0_i32 = arith.constant 0 : i32
    %c0_i32_0 = arith.constant 0 : i32
    %c0_i32_1 = arith.constant 0 : i32
    %c0_i32_2 = arith.constant 0 : i32
    return %c0_i32, %c0_i32_0, %c0_i32_1 : i32, i32, i32
  }
  func.func @transform_8(%arg0: i32) -> (i32, i32) {
    %c0_i32 = arith.constant 0 : i32
    %c0_i32_0 = arith.constant 0 : i32
    %c0_i32_1 = arith.constant 0 : i32
    return %c0_i32, %c0_i32_0 : i32, i32
  }
}

</mosaic_0001>

<llo_original>
// kernel: ink_detector_forward.3
$region0: #{ink_detector_forward.3}
  #allocation0 [shape = 'u32[]', space=smem, size = 0x4, offset = 0x4, fixed_abs, tag = 'smem constant byte address 0x4 - core index']
  #allocation1 [shape = 'u32[144,128]{1,0:T(1,128)}', space=vmem, size = 0x12000, scoped, tag = 'internal scratch']
  %s0 = inlined_call_operand.vmem [shape: bf16[16,27], index: 0, kind: input, shape index: {}]
  %s1 = inlined_call_operand.vmem [shape: bf16[27,1024], index: 1, kind: input, shape index: {}]
  %s2 = inlined_call_operand.vmem [shape: f32[3,16,1], index: 2, kind: input, shape index: {}]
  %s3 = inlined_call_operand.vmem [shape: bf16[16,1024], index: 3, kind: output, shape index: {}]
  %s4 = sld [smem:[#allocation0]]
  $region22: #{ink_detector_forward.3} parent=0
    _
  %s6 = ssub.s32 1, %s4
  %s7 = scalar_select 0, %s6, %s4
  // Predicated region
  $region2: #{ink_detector_forward.3} parent=0 // pred_check
    _
  $region3: #{ink_detector_forward.3} parent=0 // pred_check_branch
    %9 = sbr.rel (0) target = $region5
  $region4: #{ink_detector_forward.3} parent=0 // pred_region
    _
  $region5: #{ink_detector_forward.3} parent=0 // pred_fallthru
    _
  // Predicated region
  $region6: #{ink_detector_forward.3} parent=0 // pred_check
    _
  $region7: #{ink_detector_forward.3} parent=0 // pred_check_branch
    %11 = sbr.rel (0) target = $region9
  $region8: #{ink_detector_forward.3} parent=0 // pred_region
    _
  $region9: #{ink_detector_forward.3} parent=0 // pred_fallthru
    _
  // Predicated region
  $region10: #{ink_detector_forward.3} parent=0 // pred_check
    _
  $region11: #{ink_detector_forward.3} parent=0 // pred_check_branch
    %13 = sbr.rel (0) target = $region13
  $region12: #{ink_detector_forward.3} parent=0 // pred_region
    _
  $region13: #{ink_detector_forward.3} parent=0 // pred_fallthru
    _
  %v15 = vld [vmem:[%s0] sm:$0xf]
  %v16 = vld [vmem:[%s0 + $0x4] sm:$0xf]
  %v17 = vld [vmem:[%s1] sm:$0xff]
  %v18 = vld [vmem:[%s1 + $0x8] sm:$0xff]
  %v19 = vld [vmem:[%s1 + $0x10] sm:$0xff]
  %v20 = vld [vmem:[%s1 + $0x18] sm:$0xff]
  %v21 = vld [vmem:[%s1 + $0x20] sm:$0xff]
  %v22 = vld [vmem:[%s1 + $0x28] sm:$0xff]
  %v23 = vld [vmem:[%s1 + $0x30] sm:$0xff]
  %v24 = vld [vmem:[%s1 + $0x38] sm:$0xff]
  %v25 = vld [vmem:[%s1 + $0x40] sm:$0xff]
  %v26 = vld [vmem:[%s1 + $0x48] sm:$0xff]
  %v27 = vld [vmem:[%s1 + $0x50] sm:$0xff]
  %v28 = vld [vmem:[%s1 + $0x58] sm:$0xff]
  %v29 = vld [vmem:[%s1 + $0x60] sm:$0x33]
  %v30 = vld [vmem:[%s1 + $0x68] sm:$0x33]
  %v31 = vld [vmem:[%s1 + $0x70] sm:$0x33]
  %v32 = vld [vmem:[%s1 + $0x78] sm:$0x33]
  %v33 = vld [vmem:[%s2] sm:$0xff]
  %v34 = vld [vmem:[%s2 + $0x8] sm:$0xff]
  %36 = vset.pattern.permute.xlu0 0
  %37 = vperm.xlu0 %36, %v33
  %v38 = vpop.permute.xlu0 %37
  %41 = vset.pattern.permute.xlu0 0
  %42 = vperm.xlu0 %41, %v34
  %v43 = vpop.permute.xlu0 %42
  %v47 = vunpack.c.l.b16 %v15
  %v48 = vunpack.c.l.b16 %v16
  %v49 = vpack.c.b16 %v48, %v47
  %v66 = vunpack.c.l.b16 %v17
  %v67 = vunpack.c.h.b16 %v17
  %v68 = vunpack.c.l.b16 %v18
  %v69 = vunpack.c.h.b16 %v18
  %v70 = vunpack.c.l.b16 %v19
  %v71 = vunpack.c.h.b16 %v19
  %v72 = vunpack.c.l.b16 %v20
  %v73 = vunpack.c.h.b16 %v20
  %v74 = vunpack.c.l.b16 %v21
  %v75 = vunpack.c.h.b16 %v21
  %v76 = vunpack.c.l.b16 %v22
  %v77 = vunpack.c.h.b16 %v22
  %v78 = vunpack.c.l.b16 %v23
  %v79 = vunpack.c.h.b16 %v23
  %v80 = vunpack.c.l.b16 %v24
  %v81 = vunpack.c.h.b16 %v24
  %v82 = vunpack.c.l.b16 %v25
  %v83 = vunpack.c.h.b16 %v25
  %v84 = vunpack.c.l.b16 %v26
  %v85 = vunpack.c.h.b16 %v26
  %v86 = vunpack.c.l.b16 %v27
  %v87 = vunpack.c.h.b16 %v27
  %v88 = vunpack.c.l.b16 %v28
  %v89 = vunpack.c.h.b16 %v28
  %v90 = vunpack.c.l.b16 %v29
  %v91 = vunpack.c.h.b16 %v29
  %v92 = vunpack.c.l.b16 %v30
  %v93 = vunpack.c.h.b16 %v30
  %v94 = vunpack.c.l.b16 %v31
  %v95 = vunpack.c.h.b16 %v31
  %v96 = vunpack.c.l.b16 %v32
  %v97 = vunpack.c.h.b16 %v32
  %v98 = vpack.c.b16 %v74, %v66
  %v99 = vpack.c.b16 %v75, %v67
  %v100 = vpack.c.b16 %v76, %v68
  %v101 = vpack.c.b16 %v77, %v69
  %v102 = vpack.c.b16 %v78, %v70
  %v103 = vpack.c.b16 %v79, %v71
  %v104 = vpack.c.b16 %v80, %v72
  %v105 = vpack.c.b16 %v81, %v73
  %v106 = vpack.c.b16 %v90, %v82
  %v107 = vpack.c.b16 %v91, %v83
  %v108 = vpack.c.b16 %v92, %v84
  %v109 = vpack.c.b16 %v93, %v85
  %v110 = vpack.c.b16 %v94, %v86
  %v111 = vpack.c.b16 %v95, %v87
  %v112 = vpack.c.b16 %v96, %v88
  %v113 = vpack.c.b16 %v97, %v89
  %vm122 = vcmask 220160
  %v124 = vsel %vm122, %v49, 0
  %vm126 = vcmask 1044480
  %vm127 = vcmask 1045504
  %v128 = vsel %vm126, 4294967295, 65535
  %v129 = vsel %vm127, %v128, 0
  %v131 = vand.u32 %v106, %v129
  %v134 = vand.u32 %v107, %v129
  %v137 = vand.u32 %v108, %v129
  %v140 = vand.u32 %v109, %v129
  %v143 = vand.u32 %v110, %v129
  %v146 = vand.u32 %v111, %v129
  %v149 = vand.u32 %v112, %v129
  %v152 = vand.u32 %v113, %v129
  %154 = vmatprep.subr.bf16.mxu0 %v99
  %155 = vmatpush1.bf16.msra.mxu0 %v98
  %156 = vmatprep.subr.bf16.mxu0 %v134
  %157 = vmatpush1.bf16.msra.mxu0 %v131
  %158 = vmatprep.subr.bf16.mxu0 0
  %159 = vmatpush1.bf16.msra.mxu0 0
  %160 = vmatprep.subr.bf16.mxu0 0
  %161 = vmatpush1.bf16.msra.mxu0 0
  %162 = vmatprep.subr.bf16.mxu0 0
  %163 = vmatpush1.bf16.msra.mxu0 0
  %164 = vmatprep.subr.bf16.mxu0 0
  %165 = vmatpush1.bf16.msra.mxu0 0
  %166 = vmatprep.subr.bf16.mxu0 0
  %167 = vmatpush1.bf16.msra.mxu0 0
  %168 = vmatprep.subr.bf16.mxu0 0
  %169 = vmatpush1.bf16.msra.mxu0 0
  %170 = vmatprep.subr.bf16.mxu0 0
  %171 = vmatpush1.bf16.msra.mxu0 0
  %172 = vmatprep.subr.bf16.mxu0 0
  %173 = vmatpush1.bf16.msra.mxu0 0
  %174 = vmatprep.subr.bf16.mxu0 0
  %175 = vmatpush1.bf16.msra.mxu0 0
  %176 = vmatprep.subr.bf16.mxu0 0
  %177 = vmatpush1.bf16.msra.mxu0 0
  %178 = vmatprep.subr.bf16.mxu0 0
  %179 = vmatpush1.bf16.msra.mxu0 0
  %180 = vmatprep.subr.bf16.mxu0 0
  %181 = vmatpush1.bf16.msra.mxu0 0
  %182 = vmatprep.subr.bf16.mxu0 0
  %183 = vmatpush1.bf16.msra.mxu0 0
  %184 = vmatprep.subr.bf16.mxu0 0
  %185 = vmatpush1.bf16.msra.mxu0 0
  %186 = vmatprep.mubr.bf16.mxu0 0
  %187 = vmatmul.mubr.bf16.gmra.mrb[0].mxu0 %v124
  %v188 = vpop.f32.mrb[0].mxu0
  %v189 = vadd.f32 %v38, %v188
  %v190 = vpop.f32.mrb[0].mxu0
  %v191 = vadd.f32 %v38, %v190
  %v192 = vpop.f32.mrb[0].mxu0
  %v193 = vadd.f32 %v43, %v192
  %v194 = vpop.f32.mrb[0].mxu0
  %v195 = vadd.f32 %v43, %v194
  %196 = vdwg.mxu0
  %197 = vmatprep.subr.bf16.mxu0 %v101
  %198 = vmatpush1.bf16.msra.mxu0 %v100
  %199 = vmatprep.subr.bf16.mxu0 %v140
  %200 = vmatpush1.bf16.msra.mxu0 %v137
  %201 = vmatprep.subr.bf16.mxu0 0
  %202 = vmatpush1.bf16.msra.mxu0 0
  %203 = vmatprep.subr.bf16.mxu0 0
  %204 = vmatpush1.bf16.msra.mxu0 0
  %205 = vmatprep.subr.bf16.mxu0 0
  %206 = vmatpush1.bf16.msra.mxu0 0
  %207 = vmatprep.subr.bf16.mxu0 0
  %208 = vmatpush1.bf16.msra.mxu0 0
  %209 = vmatprep.subr.bf16.mxu0 0
  %210 = vmatpush1.bf16.msra.mxu0 0
  %211 = vmatprep.subr.bf16.mxu0 0
  %212 = vmatpush1.bf16.msra.mxu0 0
  %213 = vmatprep.subr.bf16.mxu0 0
  %214 = vmatpush1.bf16.msra.mxu0 0
  %215 = vmatprep.subr.bf16.mxu0 0
  %216 = vmatpush1.bf16.msra.mxu0 0
  %217 = vmatprep.subr.bf16.mxu0 0
  %218 = vmatpush1.bf16.msra.mxu0 0
  %219 = vmatprep.subr.bf16.mxu0 0
  %220 = vmatpush1.bf16.msra.mxu0 0
  %221 = vmatprep.subr.bf16.mxu0 0
  %222 = vmatpush1.bf16.msra.mxu0 0
  %223 = vmatprep.subr.bf16.mxu0 0
  %224 = vmatpush1.bf16.msra.mxu0 0
  %225 = vmatprep.subr.bf16.mxu0 0
  %226 = vmatpush1.bf16.msra.mxu0 0
  %227 = vmatprep.subr.bf16.mxu0 0
  %228 = vmatpush1.bf16.msra.mxu0 0
  %229 = vmatprep.mubr.bf16.mxu0 0
  %230 = vmatmul.mubr.bf16.gmra.mrb[0].mxu0 %v124
  %v231 = vpop.f32.mrb[0].mxu0
  %v232 = vadd.f32 %v38, %v231
  %v233 = vpop.f32.mrb[0].mxu0
  %v234 = vadd.f32 %v38, %v233
  %v235 = vpop.f32.mrb[0].mxu0
  %v236 = vadd.f32 %v43, %v235
  %v237 = vpop.f32.mrb[0].mxu0
  %v238 = vadd.f32 %v43, %v237
  %239 = vdwg.mxu0
  %240 = vmatprep.subr.bf16.mxu0 %v103
  %241 = vmatpush1.bf16.msra.mxu0 %v102
  %242 = vmatprep.subr.bf16.mxu0 %v146
  %243 = vmatpush1.bf16.msra.mxu0 %v143
  %244 = vmatprep.subr.bf16.mxu0 0
  %245 = vmatpush1.bf16.msra.mxu0 0
  %246 = vmatprep.subr.bf16.mxu0 0
  %247 = vmatpush1.bf16.msra.mxu0 0
  %248 = vmatprep.subr.bf16.mxu0 0
  %249 = vmatpush1.bf16.msra.mxu0 0
  %250 = vmatprep.subr.bf16.mxu0 0
  %251 = vmatpush1.bf16.msra.mxu0 0
  %252 = vmatprep.subr.bf16.mxu0 0
  %253 = vmatpush1.bf16.msra.mxu0 0
  %254 = vmatprep.subr.bf16.mxu0 0
  %255 = vmatpush1.bf16.msra.mxu0 0
  %256 = vmatprep.subr.bf16.mxu0 0
  %257 = vmatpush1.bf16.msra.mxu0 0
  %258 = vmatprep.subr.bf16.mxu0 0
  %259 = vmatpush1.bf16.msra.mxu0 0
  %260 = vmatprep.subr.bf16.mxu0 0
  %261 = vmatpush1.bf16.msra.mxu0 0
  %262 = vmatprep.subr.bf16.mxu0 0
  %263 = vmatpush1.bf16.msra.mxu0 0
  %264 = vmatprep.subr.bf16.mxu0 0
  %265 = vmatpush1.bf16.msra.mxu0 0
  %266 = vmatprep.subr.bf16.mxu0 0
  %267 = vmatpush1.bf16.msra.mxu0 0
  %268 = vmatprep.subr.bf16.mxu0 0
  %269 = vmatpush1.bf16.msra.mxu0 0
  %270 = vmatprep.subr.bf16.mxu0 0
  %271 = vmatpush1.bf16.msra.mxu0 0
  %272 = vmatprep.mubr.bf16.mxu0 0
  %273 = vmatmul.mubr.bf16.gmra.mrb[0].mxu0 %v124
  %v274 = vpop.f32.mrb[0].mxu0
  %v275 = vadd.f32 %v38, %v274
  %v276 = vpop.f32.mrb[0].mxu0
  %v277 = vadd.f32 %v38, %v276
  %v278 = vpop.f32.mrb[0].mxu0
  %v279 = vadd.f32 %v43, %v278
  %v280 = vpop.f32.mrb[0].mxu0
  %v281 = vadd.f32 %v43, %v280
  %282 = vdwg.mxu0
  %283 = vmatprep.subr.bf16.mxu0 %v105
  %284 = vmatpush1.bf16.msra.mxu0 %v104
  %285 = vmatprep.subr.bf16.mxu0 %v152
  %286 = vmatpush1.bf16.msra.mxu0 %v149
  %287 = vmatprep.subr.bf16.mxu0 0
  %288 = vmatpush1.bf16.msra.mxu0 0
  %289 = vmatprep.subr.bf16.mxu0 0
  %290 = vmatpush1.bf16.msra.mxu0 0
  %291 = vmatprep.subr.bf16.mxu0 0
  %292 = vmatpush1.bf16.msra.mxu0 0
  %293 = vmatprep.subr.bf16.mxu0 0
  %294 = vmatpush1.bf16.msra.mxu0 0
  %295 = vmatprep.subr.bf16.mxu0 0
  %296 = vmatpush1.bf16.msra.mxu0 0
  %297 = vmatprep.subr.bf16.mxu0 0
  %298 = vmatpush1.bf16.msra.mxu0 0
  %299 = vmatprep.subr.bf16.mxu0 0
  %300 = vmatpush1.bf16.msra.mxu0 0
  %301 = vmatprep.subr.bf16.mxu0 0
  %302 = vmatpush1.bf16.msra.mxu0 0
  %303 = vmatprep.subr.bf16.mxu0 0
  %304 = vmatpush1.bf16.msra.mxu0 0
  %305 = vmatprep.subr.bf16.mxu0 0
  %306 = vmatpush1.bf16.msra.mxu0 0
  %307 = vmatprep.subr.bf16.mxu0 0
  %308 = vmatpush1.bf16.msra.mxu0 0
  %309 = vmatprep.subr.bf16.mxu0 0
  %310 = vmatpush1.bf16.msra.mxu0 0
  %311 = vmatprep.subr.bf16.mxu0 0
  %312 = vmatpush1.bf16.msra.mxu0 0
  %313 = vmatprep.subr.bf16.mxu0 0
  %314 = vmatpush1.bf16.msra.mxu0 0
  %315 = vmatprep.mubr.bf16.mxu0 0
  %316 = vmatmul.mubr.bf16.gmra.mrb[0].mxu0 %v124
  %v317 = vpop.f32.mrb[0].mxu0
  %v318 = vadd.f32 %v38, %v317
  %v319 = vpop.f32.mrb[0].mxu0
  %v320 = vadd.f32 %v38, %v319
  %v321 = vpop.f32.mrb[0].mxu0
  %v322 = vadd.f32 %v43, %v321
  %v323 = vpop.f32.mrb[0].mxu0
  %v324 = vadd.f32 %v43, %v323
  %325 = vdwg.mxu0
  %v326 = vmax.f32 %v189, 0.0
  %v327 = vmax.f32 %v191, 0.0
  %v328 = vmax.f32 %v232, 0.0
  %v329 = vmax.f32 %v234, 0.0
  %v330 = vmax.f32 %v275, 0.0
  %v331 = vmax.f32 %v277, 0.0
  %v332 = vmax.f32 %v318, 0.0
  %v333 = vmax.f32 %v320, 0.0
  %v334 = vmax.f32 %v193, 0.0
  %v335 = vmax.f32 %v195, 0.0
  %v336 = vmax.f32 %v236, 0.0
  %v337 = vmax.f32 %v238, 0.0
  %v338 = vmax.f32 %v279, 0.0
  %v339 = vmax.f32 %v281, 0.0
  %v340 = vmax.f32 %v322, 0.0
  %v341 = vmax.f32 %v324, 0.0
  %s342 = scalar_lea.vmem %s2, 16
  %v343 = vld [vmem:[%s342] sm:$0xff]
  %v344 = vld [vmem:[%s342 + $0x8] sm:$0xff]
  %346 = vset.pattern.permute.xlu0 0
  %347 = vperm.xlu0 %346, %v343
  %v348 = vpop.permute.xlu0 %347
  %351 = vset.pattern.permute.xlu0 0
  %352 = vperm.xlu0 %351, %v344
  %v353 = vpop.permute.xlu0 %352
  %v355 = vmul.f32 %v326, %v348
  %v356 = vmul.f32 %v327, %v348
  %v357 = vmul.f32 %v328, %v348
  %v358 = vmul.f32 %v329, %v348
  %v359 = vmul.f32 %v330, %v348
  %v360 = vmul.f32 %v331, %v348
  %v361 = vmul.f32 %v332, %v348
  %v362 = vmul.f32 %v333, %v348
  %v363 = vmul.f32 %v334, %v353
  %v364 = vmul.f32 %v335, %v353
  %v365 = vmul.f32 %v336, %v353
  %v366 = vmul.f32 %v337, %v353
  %v367 = vmul.f32 %v338, %v353
  %v368 = vmul.f32 %v339, %v353
  %v369 = vmul.f32 %v340, %v353
  %v370 = vmul.f32 %v341, %v353
  %s371 = scalar_lea.vmem %s2, 32
  %v372 = vld [vmem:[%s371] sm:$0xff]
  %v373 = vld [vmem:[%s371 + $0x8] sm:$0xff]
  %375 = vset.pattern.permute.xlu0 0
  %376 = vperm.xlu0 %375, %v372
  %v377 = vpop.permute.xlu0 %376
  %380 = vset.pattern.permute.xlu0 0
  %381 = vperm.xlu0 %380, %v373
  %v382 = vpop.permute.xlu0 %381
  %v384 = vadd.f32 %v355, %v377
  %v385 = vadd.f32 %v356, %v377
  %v386 = vadd.f32 %v357, %v377
  %v387 = vadd.f32 %v358, %v377
  %v388 = vadd.f32 %v359, %v377
  %v389 = vadd.f32 %v360, %v377
  %v390 = vadd.f32 %v361, %v377
  %v391 = vadd.f32 %v362, %v377
  %v392 = vadd.f32 %v363, %v382
  %v393 = vadd.f32 %v364, %v382
  %v394 = vadd.f32 %v365, %v382
  %v395 = vadd.f32 %v366, %v382
  %v396 = vadd.f32 %v367, %v382
  %v397 = vadd.f32 %v368, %v382
  %v398 = vadd.f32 %v369, %v382
  %v399 = vadd.f32 %v370, %v382
  %v400 = vpack.c.bf16 %v392, %v384
  %v401 = vpack.c.bf16 %v393, %v385
  %v402 = vpack.c.bf16 %v394, %v386
  %v403 = vpack.c.bf16 %v395, %v387
  %v404 = vpack.c.bf16 %v396, %v388
  %v405 = vpack.c.bf16 %v397, %v389
  %v406 = vpack.c.bf16 %v398, %v390
  %v407 = vpack.c.bf16 %v399, %v391
  %v416 = vunpack.c.l.b16 %v400
  %v417 = vunpack.c.l.b16 %v401
  %v418 = vunpack.c.l.b16 %v402
  %v419 = vunpack.c.l.b16 %v403
  %v420 = vunpack.c.l.b16 %v404
  %v421 = vunpack.c.l.b16 %v405
  %v422 = vunpack.c.l.b16 %v406
  %v423 = vunpack.c.l.b16 %v407
  %v424 = vunpack.c.h.b16 %v400
  %v425 = vunpack.c.h.b16 %v401
  %v426 = vunpack.c.h.b16 %v402
  %v427 = vunpack.c.h.b16 %v403
  %v428 = vunpack.c.h.b16 %v404
  %v429 = vunpack.c.h.b16 %v405
  %v430 = vunpack.c.h.b16 %v406
  %v431 = vunpack.c.h.b16 %v407
  %v432 = vpack.c.b16 %v417, %v416
  %v433 = vpack.c.b16 %v419, %v418
  %v434 = vpack.c.b16 %v421, %v420
  %v435 = vpack.c.b16 %v423, %v422
  %v436 = vpack.c.b16 %v425, %v424
  %v437 = vpack.c.b16 %v427, %v426
  %v438 = vpack.c.b16 %v429, %v428
  %v439 = vpack.c.b16 %v431, %v430
  %448 = vst [vmem:[%s3] sm:$0xff] %v432
  %449 = vst [vmem:[%s3 + $0x8] sm:$0xff] %v433
  %450 = vst [vmem:[%s3 + $0x10] sm:$0xff] %v434
  %451 = vst [vmem:[%s3 + $0x18] sm:$0xff] %v435
  %452 = vst [vmem:[%s3 + $0x20] sm:$0xff] %v436
  %453 = vst [vmem:[%s3 + $0x28] sm:$0xff] %v437
  %454 = vst [vmem:[%s3 + $0x30] sm:$0xff] %v438
  %455 = vst [vmem:[%s3 + $0x38] sm:$0xff] %v439
  // Predicated region
  $region14: #{ink_detector_forward.3} parent=0 // pred_check
    _
  $region15: #{ink_detector_forward.3} parent=0 // pred_check_branch
    %457 = sbr.rel (0) target = $region17
  $region16: #{ink_detector_forward.3} parent=0 // pred_region
    _
  $region17: #{ink_detector_forward.3} parent=0 // pred_fallthru
    _
  // Predicated region
  $region18: #{ink_detector_forward.3} parent=0 // pred_check
    _
  $region19: #{ink_detector_forward.3} parent=0 // pred_check_branch
    %459 = sbr.rel (0) target = $region21
  $region20: #{ink_detector_forward.3} parent=0 // pred_region
    _
  $region21: #{ink_detector_forward.3} parent=0 // pred_fallthru
    _

// kernel: ink_detector_forward.4
$region0: #{ink_detector_forward.4}
  #allocation0 [shape = 'u32[]', space=smem, size = 0x4, offset = 0x4, fixed_abs, tag = 'smem constant byte address 0x4 - core index']
  #allocation1 [shape = 'u32[144,128]{1,0:T(1,128)}', space=vmem, size = 0x12000, scoped, tag = 'internal scratch']
  %s0 = inlined_call_operand.vmem [shape: bf16[32,432], index: 0, kind: input, shape index: {}]
  %s1 = inlined_call_operand.vmem [shape: bf16[432,128], index: 1, kind: input, shape index: {}]
  %s2 = inlined_call_operand.vmem [shape: f32[3,32,1], index: 2, kind: input, shape index: {}]
  %s3 = inlined_call_operand.vmem [shape: bf16[32,128], index: 3, kind: output, shape index: {}]
  %s4 = sld [smem:[#allocation0]]
  $region22: #{ink_detector_forward.4} parent=0
    _
  %s6 = ssub.s32 1, %s4
  %s7 = scalar_select 0, %s6, %s4
  // Predicated region
  $region2: #{ink_detector_forward.4} parent=0 // pred_check
    _
  $region3: #{ink_detector_forward.4} parent=0 // pred_check_branch
    %9 = sbr.rel (0) target = $region5
  $region4: #{ink_detector_forward.4} parent=0 // pred_region
    _
  $region5: #{ink_detector_forward.4} parent=0 // pred_fallthru
    _
  // Predicated region
  $region6: #{ink_detector_forward.4} parent=0 // pred_check
    _
  $region7: #{ink_detector_forward.4} parent=0 // pred_check_branch
    %11 = sbr.rel (0) target = $region9
  $region8: #{ink_detector_forward.4} parent=0 // pred_region
    _
  $region9: #{ink_detector_forward.4} parent=0 // pred_fallthru
    _
  // Predicated region
  $region10: #{ink_detector_forward.4} parent=0 // pred_check
    _
  $region11: #{ink_detector_forward.4} parent=0 // pred_check_branch
    %13 = sbr.rel (0) target = $region13
  $region12: #{ink_detector_forward.4} parent=0 // pred_region
    _
  $region13: #{ink_detector_forward.4} parent=0 // pred_fallthru
    _
  %v15 = vld [vmem:[%s0] sm:$0xff]
  %v16 = vld [vmem:[%s0 + $0x8] sm:$0xff]
  %v17 = vld [vmem:[%s0 + $0x10] sm:$0xff]
  %v18 = vld [vmem:[%s0 + $0x18] sm:$0xff]
  %v19 = vld [vmem:[%s0 + $0x20] sm:$0xff]
  %v20 = vld [vmem:[%s0 + $0x28] sm:$0xff]
  %v21 = vld [vmem:[%s0 + $0x30] sm:$0xff]
  %v22 = vld [vmem:[%s0 + $0x38] sm:$0xff]
  %v23 = vld [vmem:[%s1] sm:$0xf]
  %v24 = vld [vmem:[%s1 + $0x4] sm:$0xf]
  %v25 = vld [vmem:[%s1 + $0x8] sm:$0xf]
  %v26 = vld [vmem:[%s1 + $0xc] sm:$0xf]
  %v27 = vld [vmem:[%s1 + $0x10] sm:$0xf]
  %v28 = vld [vmem:[%s1 + $0x14] sm:$0xf]
  %v29 = vld [vmem:[%s1 + $0x18] sm:$0xf]
  %v30 = vld [vmem:[%s1 + $0x1c] sm:$0xf]
  %v31 = vld [vmem:[%s1 + $0x20] sm:$0xf]
  %v32 = vld [vmem:[%s1 + $0x24] sm:$0xf]
  %v33 = vld [vmem:[%s1 + $0x28] sm:$0xf]
  %v34 = vld [vmem:[%s1 + $0x2c] sm:$0xf]
  %v35 = vld [vmem:[%s1 + $0x30] sm:$0xf]
  %v36 = vld [vmem:[%s1 + $0x34] sm:$0xf]
  %v37 = vld [vmem:[%s1 + $0x38] sm:$0xf]
  %v38 = vld [vmem:[%s1 + $0x3c] sm:$0xf]
  %v39 = vld [vmem:[%s1 + $0x40] sm:$0xf]
  %v40 = vld [vmem:[%s1 + $0x44] sm:$0xf]
  %v41 = vld [vmem:[%s1 + $0x48] sm:$0xf]
  %v42 = vld [vmem:[%s1 + $0x4c] sm:$0xf]
  %v43 = vld [vmem:[%s1 + $0x50] sm:$0xf]
  %v44 = vld [vmem:[%s1 + $0x54] sm:$0xf]
  %v45 = vld [vmem:[%s1 + $0x58] sm:$0xf]
  %v46 = vld [vmem:[%s1 + $0x5c] sm:$0xf]
  %v47 = vld [vmem:[%s1 + $0x60] sm:$0xf]
  %v48 = vld [vmem:[%s1 + $0x64] sm:$0xf]
  %v49 = vld [vmem:[%s1 + $0x68] sm:$0xf]
  %v50 = vld [vmem:[%s1 + $0x6c] sm:$0xf]
  %v51 = vld [vmem:[%s1 + $0x70] sm:$0xf]
  %v52 = vld [vmem:[%s1 + $0x74] sm:$0xf]
  %v53 = vld [vmem:[%s1 + $0x78] sm:$0xf]
  %v54 = vld [vmem:[%s1 + $0x7c] sm:$0xf]
  %v55 = vld [vmem:[%s1 + $0x80] sm:$0xf]
  %v56 = vld [vmem:[%s1 + $0x84] sm:$0xf]
  %v57 = vld [vmem:[%s1 + $0x88] sm:$0xf]
  %v58 = vld [vmem:[%s1 + $0x8c] sm:$0xf]
  %v59 = vld [vmem:[%s1 + $0x90] sm:$0xf]
  %v60 = vld [vmem:[%s1 + $0x94] sm:$0xf]
  %v61 = vld [vmem:[%s1 + $0x98] sm:$0xf]
  %v62 = vld [vmem:[%s1 + $0x9c] sm:$0xf]
  %v63 = vld [vmem:[%s1 + $0xa0] sm:$0xf]
  %v64 = vld [vmem:[%s1 + $0xa4] sm:$0xf]
  %v65 = vld [vmem:[%s1 + $0xa8] sm:$0xf]
  %v66 = vld [vmem:[%s1 + $0xac] sm:$0xf]
  %v67 = vld [vmem:[%s1 + $0xb0] sm:$0xf]
  %v68 = vld [vmem:[%s1 + $0xb4] sm:$0xf]
  %v69 = vld [vmem:[%s1 + $0xb8] sm:$0xf]
  %v70 = vld [vmem:[%s1 + $0xbc] sm:$0xf]
  %v71 = vld [vmem:[%s1 + $0xc0] sm:$0xf]
  %v72 = vld [vmem:[%s1 + $0xc4] sm:$0xf]
  %v73 = vld [vmem:[%s1 + $0xc8] sm:$0xf]
  %v74 = vld [vmem:[%s1 + $0xcc] sm:$0xf]
  %v75 = vld [vmem:[%s1 + $0xd0] sm:$0xf]
  %v76 = vld [vmem:[%s1 + $0xd4] sm:$0xf]
  %v77 = vld [vmem:[%s2] sm:$0xff]
  %v78 = vld [vmem:[%s2 + $0x8] sm:$0xff]
  %v79 = vld [vmem:[%s2 + $0x10] sm:$0xff]
  %v80 = vld [vmem:[%s2 + $0x18] sm:$0xff]
  %82 = vset.pattern.permute.xlu0 0
  %83 = vperm.xlu0 %82, %v77
  %v84 = vpop.permute.xlu0 %83
  %87 = vset.pattern.permute.xlu0 0
  %88 = vperm.xlu0 %87, %v78
  %v89 = vpop.permute.xlu0 %88
  %92 = vset.pattern.permute.xlu0 0
  %93 = vperm.xlu0 %92, %v79
  %v94 = vpop.permute.xlu0 %93
  %97 = vset.pattern.permute.xlu0 0
  %98 = vperm.xlu0 %97, %v80
  %v99 = vpop.permute.xlu0 %98
  %v109 = vunpack.c.l.b16 %v15
  %v110 = vunpack.c.h.b16 %v15
  %v111 = vunpack.c.l.b16 %v16
  %v112 = vunpack.c.h.b16 %v16
  %v113 = vunpack.c.l.b16 %v17
  %v114 = vunpack.c.h.b16 %v17
  %v115 = vunpack.c.l.b16 %v18
  %v116 = vunpack.c.h.b16 %v18
  %v117 = vunpack.c.l.b16 %v19
  %v118 = vunpack.c.h.b16 %v19
  %v119 = vunpack.c.l.b16 %v20
  %v120 = vunpack.c.h.b16 %v20
  %v121 = vunpack.c.l.b16 %v21
  %v122 = vunpack.c.h.b16 %v21
  %v123 = vunpack.c.l.b16 %v22
  %v124 = vunpack.c.h.b16 %v22
  %v125 = vpack.c.b16 %v113, %v109
  %v126 = vpack.c.b16 %v114, %v110
  %v127 = vpack.c.b16 %v115, %v111
  %v128 = vpack.c.b16 %v116, %v112
  %v129 = vpack.c.b16 %v121, %v117
  %v130 = vpack.c.b16 %v122, %v118
  %v131 = vpack.c.b16 %v123, %v119
  %v132 = vpack.c.b16 %v124, %v120
  %v193 = vunpack.c.l.b16 %v23
  %v194 = vunpack.c.l.b16 %v24
  %v195 = vunpack.c.l.b16 %v25
  %v196 = vunpack.c.l.b16 %v26
  %v197 = vunpack.c.l.b16 %v27
  %v198 = vunpack.c.l.b16 %v28
  %v199 = vunpack.c.l.b16 %v29
  %v200 = vunpack.c.l.b16 %v30
  %v201 = vunpack.c.l.b16 %v31
  %v202 = vunpack.c.l.b16 %v32
  %v203 = vunpack.c.l.b16 %v33
  %v204 = vunpack.c.l.b16 %v34
  %v205 = vunpack.c.l.b16 %v35
  %v206 = vunpack.c.l.b16 %v36
  %v207 = vunpack.c.l.b16 %v37
  %v208 = vunpack.c.l.b16 %v38
  %v209 = vunpack.c.l.b16 %v39
  %v210 = vunpack.c.l.b16 %v40
  %v211 = vunpack.c.l.b16 %v41
  %v212 = vunpack.c.l.b16 %v42
  %v213 = vunpack.c.l.b16 %v43
  %v214 = vunpack.c.l.b16 %v44
  %v215 = vunpack.c.l.b16 %v45
  %v216 = vunpack.c.l.b16 %v46
  %v217 = vunpack.c.l.b16 %v47
  %v218 = vunpack.c.l.b16 %v48
  %v219 = vunpack.c.l.b16 %v49
  %v220 = vunpack.c.l.b16 %v50
  %v221 = vunpack.c.l.b16 %v51
  %v222 = vunpack.c.l.b16 %v52
  %v223 = vunpack.c.l.b16 %v53
  %v224 = vunpack.c.l.b16 %v54
  %v225 = vunpack.c.l.b16 %v55
  %v226 = vunpack.c.l.b16 %v56
  %v227 = vunpack.c.l.b16 %v57
  %v228 = vunpack.c.l.b16 %v58
  %v229 = vunpack.c.l.b16 %v59
  %v230 = vunpack.c.l.b16 %v60
  %v231 = vunpack.c.l.b16 %v61
  %v232 = vunpack.c.l.b16 %v62
  %v233 = vunpack.c.l.b16 %v63
  %v234 = vunpack.c.l.b16 %v64
  %v235 = vunpack.c.l.b16 %v65
  %v236 = vunpack.c.l.b16 %v66
  %v237 = vunpack.c.l.b16 %v67
  %v238 = vunpack.c.l.b16 %v68
  %v239 = vunpack.c.l.b16 %v69
  %v240 = vunpack.c.l.b16 %v70
  %v241 = vunpack.c.l.b16 %v71
  %v242 = vunpack.c.l.b16 %v72
  %v243 = vunpack.c.l.b16 %v73
  %v244 = vunpack.c.l.b16 %v74
  %v245 = vunpack.c.l.b16 %v75
  %v246 = vunpack.c.l.b16 %v76
  %v247 = vpack.c.b16 %v194, %v193
  %v248 = vpack.c.b16 %v196, %v195
  %v249 = vpack.c.b16 %v198, %v197
  %v250 = vpack.c.b16 %v200, %v199
  %v251 = vpack.c.b16 %v202, %v201
  %v252 = vpack.c.b16 %v204, %v203
  %v253 = vpack.c.b16 %v206, %v205
  %v254 = vpack.c.b16 %v208, %v207
  %v255 = vpack.c.b16 %v210, %v209
  %v256 = vpack.c.b16 %v212, %v211
  %v257 = vpack.c.b16 %v214, %v213
  %v258 = vpack.c.b16 %v216, %v215
  %v259 = vpack.c.b16 %v218, %v217
  %v260 = vpack.c.b16 %v220, %v219
  %v261 = vpack.c.b16 %v222, %v221
  %v262 = vpack.c.b16 %v224, %v223
  %v263 = vpack.c.b16 %v226, %v225
  %v264 = vpack.c.b16 %v228, %v227
  %v265 = vpack.c.b16 %v230, %v229
  %v266 = vpack.c.b16 %v232, %v231
  %v267 = vpack.c.b16 %v234, %v233
  %v268 = vpack.c.b16 %v236, %v235
  %v269 = vpack.c.b16 %v238, %v237
  %v270 = vpack.c.b16 %v240, %v239
  %v271 = vpack.c.b16 %v242, %v241
  %v272 = vpack.c.b16 %v244, %v243
  %v273 = vpack.c.b16 %v246, %v245
  %vm301 = vcmask 392192
  %v303 = vsel %vm301, %v128, 0
  %v306 = vsel %vm301, %v132, 0
  %308 = vmatprep.subr.bf16.mxu0 0
  %309 = vmatpush1.bf16.msra.mxu0 %v247
  %310 = vmatprep.subr.bf16.mxu0 0
  %311 = vmatpush1.bf16.msra.mxu0 %v248
  %312 = vmatprep.subr.bf16.mxu0 0
  %313 = vmatpush1.bf16.msra.mxu0 %v249
  %314 = vmatprep.subr.bf16.mxu0 0
  %315 = vmatpush1.bf16.msra.mxu0 %v250
  %316 = vmatprep.subr.bf16.mxu0 0
  %317 = vmatpush1.bf16.msra.mxu0 %v251
  %318 = vmatprep.subr.bf16.mxu0 0
  %319 = vmatpush1.bf16.msra.mxu0 %v252
  %320 = vmatprep.subr.bf16.mxu0 0
  %321 = vmatpush1.bf16.msra.mxu0 %v253
  %322 = vmatprep.subr.bf16.mxu0 0
  %323 = vmatpush1.bf16.msra.mxu0 %v254
  %324 = vmatprep.subr.bf16.mxu0 0
  %325 = vmatpush1.bf16.msra.mxu0 %v255
  %326 = vmatprep.subr.bf16.mxu0 0
  %327 = vmatpush1.bf16.msra.mxu0 %v256
  %328 = vmatprep.subr.bf16.mxu0 0
  %329 = vmatpush1.bf16.msra.mxu0 %v257
  %330 = vmatprep.subr.bf16.mxu0 0
  %331 = vmatpush1.bf16.msra.mxu0 %v258
  %332 = vmatprep.subr.bf16.mxu0 0
  %333 = vmatpush1.bf16.msra.mxu0 %v259
  %334 = vmatprep.subr.bf16.mxu0 0
  %335 = vmatpush1.bf16.msra.mxu0 %v260
  %336 = vmatprep.subr.bf16.mxu0 0
  %337 = vmatpush1.bf16.msra.mxu0 %v261
  %338 = vmatprep.subr.bf16.mxu0 0
  %339 = vmatpush1.bf16.msra.mxu0 %v262
  %340 = vmatprep.mubr.bf16.mxu0 %v126
  %341 = vmatmul.mubr.bf16.gmra.mrb[0].mxu0 %v125
  %v342 = vpop.f32.mrb[0].mxu0
  %v343 = vadd.f32 %v84, %v342
  %v344 = vpop.f32.mrb[0].mxu0
  %v345 = vpop.f32.mrb[0].mxu0
  %v346 = vadd.f32 %v89, %v345
  %v347 = vpop.f32.mrb[0].mxu0
  %348 = vmatprep.mubr.bf16.mxu0 %v130
  %349 = vmatmul.mubr.bf16.gmra.mrb[0].mxu0 %v129
  %v350 = vpop.f32.mrb[0].mxu0
  %v351 = vadd.f32 %v94, %v350
  %v352 = vpop.f32.mrb[0].mxu0
  %v353 = vpop.f32.mrb[0].mxu0
  %v354 = vadd.f32 %v99, %v353
  %v355 = vpop.f32.mrb[0].mxu0
  %356 = vdwg.mxu0
  %357 = vmatprep.subr.bf16.mxu0 0
  %358 = vmatpush1.bf16.msra.mxu0 %v263
  %359 = vmatprep.subr.bf16.mxu0 0
  %360 = vmatpush1.bf16.msra.mxu0 %v264
  %361 = vmatprep.subr.bf16.mxu0 0
  %362 = vmatpush1.bf16.msra.mxu0 %v265
  %363 = vmatprep.subr.bf16.mxu0 0
  %364 = vmatpush1.bf16.msra.mxu0 %v266
  %365 = vmatprep.subr.bf16.mxu0 0
  %366 = vmatpush1.bf16.msra.mxu0 %v267
  %367 = vmatprep.subr.bf16.mxu0 0
  %368 = vmatpush1.bf16.msra.mxu0 %v268
  %369 = vmatprep.subr.bf16.mxu0 0
  %370 = vmatpush1.bf16.msra.mxu0 %v269
  %371 = vmatprep.subr.bf16.mxu0 0
  %372 = vmatpush1.bf16.msra.mxu0 %v270
  %373 = vmatprep.subr.bf16.mxu0 0
  %374 = vmatpush1.bf16.msra.mxu0 %v271
  %375 = vmatprep.subr.bf16.mxu0 0
  %376 = vmatpush1.bf16.msra.mxu0 %v272
  %377 = vmatprep.subr.bf16.mxu0 0
  %378 = vmatpush1.bf16.msra.mxu0 %v273
  %379 = vmatprep.subr.bf16.mxu0 0
  %380 = vmatpush1.bf16.msra.mxu0 0
  %381 = vmatprep.subr.bf16.mxu0 0
  %382 = vmatpush1.bf16.msra.mxu0 0
  %383 = vmatprep.subr.bf16.mxu0 0
  %384 = vmatpush1.bf16.msra.mxu0 0
  %385 = vmatprep.subr.bf16.mxu0 0
  %386 = vmatpush1.bf16.msra.mxu0 0
  %387 = vmatprep.subr.bf16.mxu0 0
  %388 = vmatpush1.bf16.msra.mxu0 0
  %389 = vmatprep.mubr.bf16.mxu0 %v303
  %390 = vmatmul.mubr.bf16.gmra.mrb[0].mxu0 %v127
  %v391 = vpop.f32.mrb[0].mxu0
  %v392 = vadd.f32 %v343, %v391
  %v393 = vpop.f32.mrb[0].mxu0
  %v394 = vpop.f32.mrb[0].mxu0
  %v395 = vadd.f32 %v346, %v394
  %v396 = vpop.f32.mrb[0].mxu0
  %397 = vmatprep.mubr.bf16.mxu0 %v306
  %398 = vmatmul.mubr.bf16.gmra.mrb[0].mxu0 %v131
  %v399 = vpop.f32.mrb[0].mxu0
  %v400 = vadd.f32 %v351, %v399
  %v401 = vpop.f32.mrb[0].mxu0
  %v402 = vpop.f32.mrb[0].mxu0
  %v403 = vadd.f32 %v354, %v402
  %v404 = vpop.f32.mrb[0].mxu0
  %405 = vdwg.mxu0
  %v406 = vmax.f32 %v392, 0.0
  %v407 = vmax.f32 %v395, 0.0
  %v408 = vmax.f32 %v400, 0.0
  %v409 = vmax.f32 %v403, 0.0
  %s410 = scalar_lea.vmem %s2, 32
  %v411 = vld [vmem:[%s410] sm:$0xff]
  %v412 = vld [vmem:[%s410 + $0x8] sm:$0xff]
  %v413 = vld [vmem:[%s410 + $0x10] sm:$0xff]
  %v414 = vld [vmem:[%s410 + $0x18] sm:$0xff]
  %416 = vset.pattern.permute.xlu0 0
  %417 = vperm.xlu0 %416, %v411
  %v418 = vpop.permute.xlu0 %417
  %421 = vset.pattern.permute.xlu0 0
  %422 = vperm.xlu0 %421, %v412
  %v423 = vpop.permute.xlu0 %422
  %426 = vset.pattern.permute.xlu0 0
  %427 = vperm.xlu0 %426, %v413
  %v428 = vpop.permute.xlu0 %427
  %431 = vset.pattern.permute.xlu0 0
  %432 = vperm.xlu0 %431, %v414
  %v433 = vpop.permute.xlu0 %432
  %v435 = vmul.f32 %v406, %v418
  %v436 = vmul.f32 %v407, %v423
  %v437 = vmul.f32 %v408, %v428
  %v438 = vmul.f32 %v409, %v433
  %s439 = scalar_lea.vmem %s2, 64
  %v440 = vld [vmem:[%s439] sm:$0xff]
  %v441 = vld [vmem:[%s439 + $0x8] sm:$0xff]
  %v442 = vld [vmem:[%s439 + $0x10] sm:$0xff]
  %v443 = vld [vmem:[%s439 + $0x18] sm:$0xff]
  %445 = vset.pattern.permute.xlu0 0
  %446 = vperm.xlu0 %445, %v440
  %v447 = vpop.permute.xlu0 %446
  %450 = vset.pattern.permute.xlu0 0
  %451 = vperm.xlu0 %450, %v441
  %v452 = vpop.permute.xlu0 %451
  %455 = vset.pattern.permute.xlu0 0
  %456 = vperm.xlu0 %455, %v442
  %v457 = vpop.permute.xlu0 %456
  %460 = vset.pattern.permute.xlu0 0
  %461 = vperm.xlu0 %460, %v443
  %v462 = vpop.permute.xlu0 %461
  %v464 = vadd.f32 %v435, %v447
  %v465 = vadd.f32 %v436, %v452
  %v466 = vadd.f32 %v437, %v457
  %v467 = vadd.f32 %v438, %v462
  %v468 = vpack.c.bf16 %v465, %v464
  %v469 = vpack.c.bf16 %v467, %v466
  %v472 = vunpack.c.l.b16 %v468
  %v473 = vunpack.c.h.b16 %v468
  %v474 = vunpack.c.l.b16 %v469
  %v475 = vunpack.c.h.b16 %v469
  %v476 = vpack.c.b16 %v472, %v472
  %v477 = vpack.c.b16 %v473, %v473
  %v478 = vpack.c.b16 %v474, %v474
  %v479 = vpack.c.b16 %v475, %v475
  %484 = vst [vmem:[%s3] sm:$0xf] %v476
  %485 = vst [vmem:[%s3 + $0x4] sm:$0xf] %v477
  %486 = vst [vmem:[%s3 + $0x8] sm:$0xf] %v478
  %487 = vst [vmem:[%s3 + $0xc] sm:$0xf] %v479
  // Predicated region
  $region14: #{ink_detector_forward.4} parent=0 // pred_check
    _
  $region15: #{ink_detector_forward.4} parent=0 // pred_check_branch
    %489 = sbr.rel (0) target = $region17
  $region16: #{ink_detector_forward.4} parent=0 // pred_region
    _
  $region17: #{ink_detector_forward.4} parent=0 // pred_fallthru
    _
  // Predicated region
  $region18: #{ink_detector_forward.4} parent=0 // pred_check
    _
  $region19: #{ink_detector_forward.4} parent=0 // pred_check_branch
    %491 = sbr.rel (0) target = $region21
  $region20: #{ink_detector_forward.4} parent=0 // pred_region
    _
  $region21: #{ink_detector_forward.4} parent=0 // pred_fallthru
    _

// kernel: ink_detector_forward.5
$region0: #{ink_detector_forward.5}
  #allocation0 [shape = 'u32[]', space=smem, size = 0x4, offset = 0x4, fixed_abs, tag = 'smem constant byte address 0x4 - core index']
  #allocation1 [shape = 'u32[144,128]{1,0:T(1,128)}', space=vmem, size = 0x12000, scoped, tag = 'internal scratch']
  %s0 = inlined_call_operand.vmem [shape: bf16[64,864], index: 0, kind: input, shape index: {}]
  %s1 = inlined_call_operand.vmem [shape: bf16[864,16], index: 1, kind: input, shape index: {}]
  %s2 = inlined_call_operand.vmem [shape: f32[3,64,1], index: 2, kind: input, shape index: {}]
  %s3 = inlined_call_operand.vmem [shape: f32[16,2], index: 3, kind: input, shape index: {}]
  %s4 = inlined_call_operand.vmem [shape: bf16[128,64], index: 4, kind: input, shape index: {}]
  %s5 = inlined_call_operand.vmem [shape: bf16[128,128], index: 5, kind: input, shape index: {}]
  %s6 = inlined_call_operand.vmem [shape: bf16[1,128], index: 6, kind: input, shape index: {}]
  %s7 = inlined_call_operand.vmem [shape: f32[3,128,1], index: 7, kind: input, shape index: {}]
  %s8 = inlined_call_operand.hbm [shape: f32[1,2], index: 8, kind: output, shape index: {}]
  %s9 = sld [smem:[#allocation0]]
  $region42: #{ink_detector_forward.5} parent=0
    _
  %s11 = ssub.s32 1, %s9
  %s12 = scalar_select 0, %s11, %s9
  $region1: #{ink_detector_forward.5} parent=0
    #allocation2 [shape = 'u8[512]{0}', space=vmem, size = 0x400, scoped, tag = 'output window, operand 0, single buffered']
    #allocation3 [shape = 's32[1]{0}', space=sflag, size = 0x4, scoped, tag = 'scoped memory for ink_detector_forward.5']
    %13 = vsyncpa [#allocation3], 0
    // Predicated region
    $region2: #{ink_detector_forward.5} parent=1 // pred_check
      _
    $region3: #{ink_detector_forward.5} parent=1 // pred_check_branch
      %15 = sbr.rel (0) target = $region5
    $region4: #{ink_detector_forward.5} parent=1 // pred_region
      _
    $region5: #{ink_detector_forward.5} parent=1 // pred_fallthru
      _
    // Predicated region
    $region6: #{ink_detector_forward.5} parent=1 // pred_check
      _
    $region7: #{ink_detector_forward.5} parent=1 // pred_check_branch
      %17 = sbr.rel (0) target = $region9
    $region8: #{ink_detector_forward.5} parent=1 // pred_region
      _
    $region9: #{ink_detector_forward.5} parent=1 // pred_fallthru
      _
    // Predicated region
    $region10: #{ink_detector_forward.5} parent=1 // pred_check
      _
    $region11: #{ink_detector_forward.5} parent=1 // pred_check_branch
      %19 = sbr.rel (0) target = $region13
    $region12: #{ink_detector_forward.5} parent=1 // pred_region
      _
    $region13: #{ink_detector_forward.5} parent=1 // pred_fallthru
      _
    // Predicated region
    $region14: #{ink_detector_forward.5} parent=1 // pred_check
      _
    $region15: #{ink_detector_forward.5} parent=1 // pred_check_branch
      %21 = sbr.rel (0) target = $region17
    $region16: #{ink_detector_forward.5} parent=1 // pred_region
      _
    $region17: #{ink_detector_forward.5} parent=1 // pred_fallthru
      _
    // Predicated region
    $region18: #{ink_detector_forward.5} parent=1 // pred_check
      _
    $region19: #{ink_detector_forward.5} parent=1 // pred_check_branch
      %23 = sbr.rel (0) target = $region21
    $region20: #{ink_detector_forward.5} parent=1 // pred_region
      _
    $region21: #{ink_detector_forward.5} parent=1 // pred_fallthru
      _
    // Predicated region
    $region22: #{ink_detector_forward.5} parent=1 // pred_check
      _
    $region23: #{ink_detector_forward.5} parent=1 // pred_check_branch
      %25 = sbr.rel (0) target = $region25
    $region24: #{ink_detector_forward.5} parent=1 // pred_region
      _
    $region25: #{ink_detector_forward.5} parent=1 // pred_fallthru
      _
    // Predicated region
    $region26: #{ink_detector_forward.5} parent=1 // pred_check
      _
    $region27: #{ink_detector_forward.5} parent=1 // pred_check_branch
      %27 = sbr.rel (0) target = $region29
    $region28: #{ink_detector_forward.5} parent=1 // pred_region
      _
    $region29: #{ink_detector_forward.5} parent=1 // pred_fallthru
      _
    // Predicated region
    $region30: #{ink_detector_forward.5} parent=1 // pred_check
      _
    $region31: #{ink_detector_forward.5} parent=1 // pred_check_branch
      %29 = sbr.rel (0) target = $region33
    $region32: #{ink_detector_forward.5} parent=1 // pred_region
      _
    $region33: #{ink_detector_forward.5} parent=1 // pred_fallthru
      _
    %v31 = vld [vmem:[%s0] sm:$0xff]
    %v32 = vld [vmem:[%s0 + $0x8] sm:$0xff]
    %v33 = vld [vmem:[%s0 + $0x10] sm:$0xff]
    %v34 = vld [vmem:[%s0 + $0x18] sm:$0xf]
    %v35 = vld [vmem:[%s0 + $0x1c] sm:$0xff]
    %v36 = vld [vmem:[%s0 + $0x24] sm:$0xff]
    %v37 = vld [vmem:[%s0 + $0x2c] sm:$0xff]
    %v38 = vld [vmem:[%s0 + $0x34] sm:$0xf]
    %v39 = vld [vmem:[%s0 + $0x38] sm:$0xff]
    %v40 = vld [vmem:[%s0 + $0x40] sm:$0xff]
    %v41 = vld [vmem:[%s0 + $0x48] sm:$0xff]
    %v42 = vld [vmem:[%s0 + $0x50] sm:$0xf]
    %v43 = vld [vmem:[%s0 + $0x54] sm:$0xff]
    %v44 = vld [vmem:[%s0 + $0x5c] sm:$0xff]
    %v45 = vld [vmem:[%s0 + $0x64] sm:$0xff]
    %v46 = vld [vmem:[%s0 + $0x6c] sm:$0xf]
    %v47 = vld [vmem:[%s0 + $0x70] sm:$0xff]
    %v48 = vld [vmem:[%s0 + $0x78] sm:$0xff]
    %v49 = vld [vmem:[%s0 + $0x80] sm:$0xff]
    %v50 = vld [vmem:[%s0 + $0x88] sm:$0xf]
    %v51 = vld [vmem:[%s0 + $0x8c] sm:$0xff]
    %v52 = vld [vmem:[%s0 + $0x94] sm:$0xff]
    %v53 = vld [vmem:[%s0 + $0x9c] sm:$0xff]
    %v54 = vld [vmem:[%s0 + $0xa4] sm:$0xf]
    %v55 = vld [vmem:[%s0 + $0xa8] sm:$0xff]
    %v56 = vld [vmem:[%s0 + $0xb0] sm:$0xff]
    %v57 = vld [vmem:[%s0 + $0xb8] sm:$0xff]
    %v58 = vld [vmem:[%s0 + $0xc0] sm:$0xf]
    %v59 = vld [vmem:[%s0 + $0xc4] sm:$0xff]
    %v60 = vld [vmem:[%s0 + $0xcc] sm:$0xff]
    %v61 = vld [vmem:[%s0 + $0xd4] sm:$0xff]
    %v62 = vld [vmem:[%s0 + $0xdc] sm:$0xf]
    %v63 = vld [vmem:[%s1] sm:$0xf]
    %v64 = vld [vmem:[%s1 + $0x4] sm:$0xf]
    %v65 = vld [vmem:[%s1 + $0x8] sm:$0xf]
    %v66 = vld [vmem:[%s1 + $0xc] sm:$0xf]
    %v67 = vld [vmem:[%s1 + $0x10] sm:$0xf]
    %v68 = vld [vmem:[%s1 + $0x14] sm:$0xf]
    %v69 = vld [vmem:[%s1 + $0x18] sm:$0xf]
    %v70 = vld [vmem:[%s1 + $0x1c] sm:$0xf]
    %v71 = vld [vmem:[%s1 + $0x20] sm:$0xf]
    %v72 = vld [vmem:[%s1 + $0x24] sm:$0xf]
    %v73 = vld [vmem:[%s1 + $0x28] sm:$0xf]
    %v74 = vld [vmem:[%s1 + $0x2c] sm:$0xf]
    %v75 = vld [vmem:[%s1 + $0x30] sm:$0xf]
    %v76 = vld [vmem:[%s1 + $0x34] sm:$0xf]
    %v77 = vld [vmem:[%s1 + $0x38] sm:$0xf]
    %v78 = vld [vmem:[%s1 + $0x3c] sm:$0xf]
    %v79 = vld [vmem:[%s1 + $0x40] sm:$0xf]
    %v80 = vld [vmem:[%s1 + $0x44] sm:$0xf]
    %v81 = vld [vmem:[%s1 + $0x48] sm:$0xf]
    %v82 = vld [vmem:[%s1 + $0x4c] sm:$0xf]
    %v83 = vld [vmem:[%s1 + $0x50] sm:$0xf]
    %v84 = vld [vmem:[%s1 + $0x54] sm:$0xf]
    %v85 = vld [vmem:[%s1 + $0x58] sm:$0xf]
    %v86 = vld [vmem:[%s1 + $0x5c] sm:$0xf]
    %v87 = vld [vmem:[%s1 + $0x60] sm:$0xf]
    %v88 = vld [vmem:[%s1 + $0x64] sm:$0xf]
    %v89 = vld [vmem:[%s1 + $0x68] sm:$0xf]
    %v90 = vld [vmem:[%s1 + $0x6c] sm:$0xf]
    %v91 = vld [vmem:[%s1 + $0x70] sm:$0xf]
    %v92 = vld [vmem:[%s1 + $0x74] sm:$0xf]
    %v93 = vld [vmem:[%s1 + $0x78] sm:$0xf]
    %v94 = vld [vmem:[%s1 + $0x7c] sm:$0xf]
    %v95 = vld [vmem:[%s1 + $0x80] sm:$0xf]
    %v96 = vld [vmem:[%s1 + $0x84] sm:$0xf]
    %v97 = vld [vmem:[%s1 + $0x88] sm:$0xf]
    %v98 = vld [vmem:[%s1 + $0x8c] sm:$0xf]
    %v99 = vld [vmem:[%s1 + $0x90] sm:$0xf]
    %v100 = vld [vmem:[%s1 + $0x94] sm:$0xf]
    %v101 = vld [vmem:[%s1 + $0x98] sm:$0xf]
    %v102 = vld [vmem:[%s1 + $0x9c] sm:$0xf]
    %v103 = vld [vmem:[%s1 + $0xa0] sm:$0xf]
    %v104 = vld [vmem:[%s1 + $0xa4] sm:$0xf]
    %v105 = vld [vmem:[%s1 + $0xa8] sm:$0xf]
    %v106 = vld [vmem:[%s1 + $0xac] sm:$0xf]
    %v107 = vld [vmem:[%s1 + $0xb0] sm:$0xf]
    %v108 = vld [vmem:[%s1 + $0xb4] sm:$0xf]
    %v109 = vld [vmem:[%s1 + $0xb8] sm:$0xf]
    %v110 = vld [vmem:[%s1 + $0xbc] sm:$0xf]
    %v111 = vld [vmem:[%s1 + $0xc0] sm:$0xf]
    %v112 = vld [vmem:[%s1 + $0xc4] sm:$0xf]
    %v113 = vld [vmem:[%s1 + $0xc8] sm:$0xf]
    %v114 = vld [vmem:[%s1 + $0xcc] sm:$0xf]
    %v115 = vld [vmem:[%s1 + $0xd0] sm:$0xf]
    %v116 = vld [vmem:[%s1 + $0xd4] sm:$0xf]
    %v117 = vld [vmem:[%s1 + $0xd8] sm:$0xf]
    %v118 = vld [vmem:[%s1 + $0xdc] sm:$0xf]
    %v119 = vld [vmem:[%s1 + $0xe0] sm:$0xf]
    %v120 = vld [vmem:[%s1 + $0xe4] sm:$0xf]
    %v121 = vld [vmem:[%s1 + $0xe8] sm:$0xf]
    %v122 = vld [vmem:[%s1 + $0xec] sm:$0xf]
    %v123 = vld [vmem:[%s1 + $0xf0] sm:$0xf]
    %v124 = vld [vmem:[%s1 + $0xf4] sm:$0xf]
    %v125 = vld [vmem:[%s1 + $0xf8] sm:$0xf]
    %v126 = vld [vmem:[%s1 + $0xfc] sm:$0xf]
    %v127 = vld [vmem:[%s1 + $0x100] sm:$0xf]
    %v128 = vld [vmem:[%s1 + $0x104] sm:$0xf]
    %v129 = vld [vmem:[%s1 + $0x108] sm:$0xf]
    %v130 = vld [vmem:[%s1 + $0x10c] sm:$0xf]
    %v131 = vld [vmem:[%s1 + $0x110] sm:$0xf]
    %v132 = vld [vmem:[%s1 + $0x114] sm:$0xf]
    %v133 = vld [vmem:[%s1 + $0x118] sm:$0xf]
    %v134 = vld [vmem:[%s1 + $0x11c] sm:$0xf]
    %v135 = vld [vmem:[%s1 + $0x120] sm:$0xf]
    %v136 = vld [vmem:[%s1 + $0x124] sm:$0xf]
    %v137 = vld [vmem:[%s1 + $0x128] sm:$0xf]
    %v138 = vld [vmem:[%s1 + $0x12c] sm:$0xf]
    %v139 = vld [vmem:[%s1 + $0x130] sm:$0xf]
    %v140 = vld [vmem:[%s1 + $0x134] sm:$0xf]
    %v141 = vld [vmem:[%s1 + $0x138] sm:$0xf]
    %v142 = vld [vmem:[%s1 + $0x13c] sm:$0xf]
    %v143 = vld [vmem:[%s1 + $0x140] sm:$0xf]
    %v144 = vld [vmem:[%s1 + $0x144] sm:$0xf]
    %v145 = vld [vmem:[%s1 + $0x148] sm:$0xf]
    %v146 = vld [vmem:[%s1 + $0x14c] sm:$0xf]
    %v147 = vld [vmem:[%s1 + $0x150] sm:$0xf]
    %v148 = vld [vmem:[%s1 + $0x154] sm:$0xf]
    %v149 = vld [vmem:[%s1 + $0x158] sm:$0xf]
    %v150 = vld [vmem:[%s1 + $0x15c] sm:$0xf]
    %v151 = vld [vmem:[%s1 + $0x160] sm:$0xf]
    %v152 = vld [vmem:[%s1 + $0x164] sm:$0xf]
    %v153 = vld [vmem:[%s1 + $0x168] sm:$0xf]
    %v154 = vld [vmem:[%s1 + $0x16c] sm:$0xf]
    %v155 = vld [vmem:[%s1 + $0x170] sm:$0xf]
    %v156 = vld [vmem:[%s1 + $0x174] sm:$0xf]
    %v157 = vld [vmem:[%s1 + $0x178] sm:$0xf]
    %v158 = vld [vmem:[%s1 + $0x17c] sm:$0xf]
    %v159 = vld [vmem:[%s1 + $0x180] sm:$0xf]
    %v160 = vld [vmem:[%s1 + $0x184] sm:$0xf]
    %v161 = vld [vmem:[%s1 + $0x188] sm:$0xf]
    %v162 = vld [vmem:[%s1 + $0x18c] sm:$0xf]
    %v163 = vld [vmem:[%s1 + $0x190] sm:$0xf]
    %v164 = vld [vmem:[%s1 + $0x194] sm:$0xf]
    %v165 = vld [vmem:[%s1 + $0x198] sm:$0xf]
    %v166 = vld [vmem:[%s1 + $0x19c] sm:$0xf]
    %v167 = vld [vmem:[%s1 + $0x1a0] sm:$0xf]
    %v168 = vld [vmem:[%s1 + $0x1a4] sm:$0xf]
    %v169 = vld [vmem:[%s1 + $0x1a8] sm:$0xf]
    %v170 = vld [vmem:[%s1 + $0x1ac] sm:$0xf]
    %v171 = vld [vmem:[%s2] sm:$0xff]
    %v172 = vld [vmem:[%s2 + $0x8] sm:$0xff]
    %v173 = vld [vmem:[%s2 + $0x10] sm:$0xff]
    %v174 = vld [vmem:[%s2 + $0x18] sm:$0xff]
    %v175 = vld [vmem:[%s2 + $0x20] sm:$0xff]
    %v176 = vld [vmem:[%s2 + $0x28] sm:$0xff]
    %v177 = vld [vmem:[%s2 + $0x30] sm:$0xff]
    %v178 = vld [vmem:[%s2 + $0x38] sm:$0xff]
    %180 = vset.pattern.permute.xlu0 0
    %181 = vperm.xlu0 %180, %v171
    %v182 = vpop.permute.xlu0 %181
    %185 = vset.pattern.permute.xlu0 0
    %186 = vperm.xlu0 %185, %v172
    %v187 = vpop.permute.xlu0 %186
    %190 = vset.pattern.permute.xlu0 0
    %191 = vperm.xlu0 %190, %v173
    %v192 = vpop.permute.xlu0 %191
    %195 = vset.pattern.permute.xlu0 0
    %196 = vperm.xlu0 %195, %v174
    %v197 = vpop.permute.xlu0 %196
    %200 = vset.pattern.permute.xlu0 0
    %201 = vperm.xlu0 %200, %v175
    %v202 = vpop.permute.xlu0 %201
    %205 = vset.pattern.permute.xlu0 0
    %206 = vperm.xlu0 %205, %v176
    %v207 = vpop.permute.xlu0 %206
    %210 = vset.pattern.permute.xlu0 0
    %211 = vperm.xlu0 %210, %v177
    %v212 = vpop.permute.xlu0 %211
    %215 = vset.pattern.permute.xlu0 0
    %216 = vperm.xlu0 %215, %v178
    %v217 = vpop.permute.xlu0 %216
    %v251 = vunpack.c.l.b16 %v31
    %v252 = vunpack.c.h.b16 %v31
    %v253 = vunpack.c.l.b16 %v32
    %v254 = vunpack.c.h.b16 %v32
    %v255 = vunpack.c.l.b16 %v33
    %v256 = vunpack.c.h.b16 %v33
    %v257 = vunpack.c.l.b16 %v34
    %v258 = vunpack.c.l.b16 %v35
    %v259 = vunpack.c.h.b16 %v35
    %v260 = vunpack.c.l.b16 %v36
    %v261 = vunpack.c.h.b16 %v36
    %v262 = vunpack.c.l.b16 %v37
    %v263 = vunpack.c.h.b16 %v37
    %v264 = vunpack.c.l.b16 %v38
    %v265 = vunpack.c.l.b16 %v39
    %v266 = vunpack.c.h.b16 %v39
    %v267 = vunpack.c.l.b16 %v40
    %v268 = vunpack.c.h.b16 %v40
    %v269 = vunpack.c.l.b16 %v41
    %v270 = vunpack.c.h.b16 %v41
    %v271 = vunpack.c.l.b16 %v42
    %v272 = vunpack.c.l.b16 %v43
    %v273 = vunpack.c.h.b16 %v43
    %v274 = vunpack.c.l.b16 %v44
    %v275 = vunpack.c.h.b16 %v44
    %v276 = vunpack.c.l.b16 %v45
    %v277 = vunpack.c.h.b16 %v45
    %v278 = vunpack.c.l.b16 %v46
    %v279 = vunpack.c.l.b16 %v47
    %v280 = vunpack.c.h.b16 %v47
    %v281 = vunpack.c.l.b16 %v48
    %v282 = vunpack.c.h.b16 %v48
    %v283 = vunpack.c.l.b16 %v49
    %v284 = vunpack.c.h.b16 %v49
    %v285 = vunpack.c.l.b16 %v50
    %v286 = vunpack.c.l.b16 %v51
    %v287 = vunpack.c.h.b16 %v51
    %v288 = vunpack.c.l.b16 %v52
    %v289 = vunpack.c.h.b16 %v52
    %v290 = vunpack.c.l.b16 %v53
    %v291 = vunpack.c.h.b16 %v53
    %v292 = vunpack.c.l.b16 %v54
    %v293 = vunpack.c.l.b16 %v55
    %v294 = vunpack.c.h.b16 %v55
    %v295 = vunpack.c.l.b16 %v56
    %v296 = vunpack.c.h.b16 %v56
    %v297 = vunpack.c.l.b16 %v57
    %v298 = vunpack.c.h.b16 %v57
    %v299 = vunpack.c.l.b16 %v58
    %v300 = vunpack.c.l.b16 %v59
    %v301 = vunpack.c.h.b16 %v59
    %v302 = vunpack.c.l.b16 %v60
    %v303 = vunpack.c.h.b16 %v60
    %v304 = vunpack.c.l.b16 %v61
    %v305 = vunpack.c.h.b16 %v61
    %v306 = vunpack.c.l.b16 %v62
    %v307 = vpack.c.b16 %v258, %v251
    %v308 = vpack.c.b16 %v259, %v252
    %v309 = vpack.c.b16 %v260, %v253
    %v310 = vpack.c.b16 %v261, %v254
    %v311 = vpack.c.b16 %v262, %v255
    %v312 = vpack.c.b16 %v263, %v256
    %v313 = vpack.c.b16 %v264, %v257
    %v314 = vpack.c.b16 %v272, %v265
    %v315 = vpack.c.b16 %v273, %v266
    %v316 = vpack.c.b16 %v274, %v267
    %v317 = vpack.c.b16 %v275, %v268
    %v318 = vpack.c.b16 %v276, %v269
    %v319 = vpack.c.b16 %v277, %v270
    %v320 = vpack.c.b16 %v278, %v271
    %v321 = vpack.c.b16 %v286, %v279
    %v322 = vpack.c.b16 %v287, %v280
    %v323 = vpack.c.b16 %v288, %v281
    %v324 = vpack.c.b16 %v289, %v282
    %v325 = vpack.c.b16 %v290, %v283
    %v326 = vpack.c.b16 %v291, %v284
    %v327 = vpack.c.b16 %v292, %v285
    %v328 = vpack.c.b16 %v300, %v293
    %v329 = vpack.c.b16 %v301, %v294
    %v330 = vpack.c.b16 %v302, %v295
    %v331 = vpack.c.b16 %v303, %v296
    %v332 = vpack.c.b16 %v304, %v297
    %v333 = vpack.c.b16 %v305, %v298
    %v334 = vpack.c.b16 %v306, %v299
    %v467 = vunpack.c.l.b16 %v63
    %v468 = vunpack.c.l.b16 %v64
    %v469 = vunpack.c.l.b16 %v65
    %v470 = vunpack.c.l.b16 %v66
    %v471 = vunpack.c.l.b16 %v67
    %v472 = vunpack.c.l.b16 %v68
    %v473 = vunpack.c.l.b16 %v69
    %v474 = vunpack.c.l.b16 %v70
    %v475 = vunpack.c.l.b16 %v71
    %v476 = vunpack.c.l.b16 %v72
    %v477 = vunpack.c.l.b16 %v73
    %v478 = vunpack.c.l.b16 %v74
    %v479 = vunpack.c.l.b16 %v75
    %v480 = vunpack.c.l.b16 %v76
    %v481 = vunpack.c.l.b16 %v77
    %v482 = vunpack.c.l.b16 %v78
    %v483 = vunpack.c.l.b16 %v79
    %v484 = vunpack.c.l.b16 %v80
    %v485 = vunpack.c.l.b16 %v81
    %v486 = vunpack.c.l.b16 %v82
    %v487 = vunpack.c.l.b16 %v83
    %v488 = vunpack.c.l.b16 %v84
    %v489 = vunpack.c.l.b16 %v85
    %v490 = vunpack.c.l.b16 %v86
    %v491 = vunpack.c.l.b16 %v87
    %v492 = vunpack.c.l.b16 %v88
    %v493 = vunpack.c.l.b16 %v89
    %v494 = vunpack.c.l.b16 %v90
    %v495 = vunpack.c.l.b16 %v91
    %v496 = vunpack.c.l.b16 %v92
    %v497 = vunpack.c.l.b16 %v93
    %v498 = vunpack.c.l.b16 %v94
    %v499 = vunpack.c.l.b16 %v95
    %v500 = vunpack.c.l.b16 %v96
    %v501 = vunpack.c.l.b16 %v97
    %v502 = vunpack.c.l.b16 %v98
    %v503 = vunpack.c.l.b16 %v99
    %v504 = vunpack.c.l.b16 %v100
    %v505 = vunpack.c.l.b16 %v101
    %v506 = vunpack.c.l.b16 %v102
    %v507 = vunpack.c.l.b16 %v103
    %v508 = vunpack.c.l.b16 %v104
    %v509 = vunpack.c.l.b16 %v105
    %v510 = vunpack.c.l.b16 %v106
    %v511 = vunpack.c.l.b16 %v107
    %v512 = vunpack.c.l.b16 %v108
    %v513 = vunpack.c.l.b16 %v109
    %v514 = vunpack.c.l.b16 %v110
    %v515 = vunpack.c.l.b16 %v111
    %v516 = vunpack.c.l.b16 %v112
    %v517 = vunpack.c.l.b16 %v113
    %v518 = vunpack.c.l.b16 %v114
    %v519 = vunpack.c.l.b16 %v115
    %v520 = vunpack.c.l.b16 %v116
    %v521 = vunpack.c.l.b16 %v117
    %v522 = vunpack.c.l.b16 %v118
    %v523 = vunpack.c.l.b16 %v119
    %v524 = vunpack.c.l.b16 %v120
    %v525 = vunpack.c.l.b16 %v121
    %v526 = vunpack.c.l.b16 %v122
    %v527 = vunpack.c.l.b16 %v123
    %v528 = vunpack.c.l.b16 %v124
    %v529 = vunpack.c.l.b16 %v125
    %v530 = vunpack.c.l.b16 %v126
    %v531 = vunpack.c.l.b16 %v127
    %v532 = vunpack.c.l.b16 %v128
    %v533 = vunpack.c.l.b16 %v129
    %v534 = vunpack.c.l.b16 %v130
    %v535 = vunpack.c.l.b16 %v131
    %v536 = vunpack.c.l.b16 %v132
    %v537 = vunpack.c.l.b16 %v133
    %v538 = vunpack.c.l.b16 %v134
    %v539 = vunpack.c.l.b16 %v135
    %v540 = vunpack.c.l.b16 %v136
    %v541 = vunpack.c.l.b16 %v137
    %v542 = vunpack.c.l.b16 %v138
    %v543 = vunpack.c.l.b16 %v139
    %v544 = vunpack.c.l.b16 %v140
    %v545 = vunpack.c.l.b16 %v141
    %v546 = vunpack.c.l.b16 %v142
    %v547 = vunpack.c.l.b16 %v143
    %v548 = vunpack.c.l.b16 %v144
    %v549 = vunpack.c.l.b16 %v145
    %v550 = vunpack.c.l.b16 %v146
    %v551 = vunpack.c.l.b16 %v147
    %v552 = vunpack.c.l.b16 %v148
    %v553 = vunpack.c.l.b16 %v149
    %v554 = vunpack.c.l.b16 %v150
    %v555 = vunpack.c.l.b16 %v151
    %v556 = vunpack.c.l.b16 %v152
    %v557 = vunpack.c.l.b16 %v153
    %v558 = vunpack.c.l.b16 %v154
    %v559 = vunpack.c.l.b16 %v155
    %v560 = vunpack.c.l.b16 %v156
    %v561 = vunpack.c.l.b16 %v157
    %v562 = vunpack.c.l.b16 %v158
    %v563 = vunpack.c.l.b16 %v159
    %v564 = vunpack.c.l.b16 %v160
    %v565 = vunpack.c.l.b16 %v161
    %v566 = vunpack.c.l.b16 %v162
    %v567 = vunpack.c.l.b16 %v163
    %v568 = vunpack.c.l.b16 %v164
    %v569 = vunpack.c.l.b16 %v165
    %v570 = vunpack.c.l.b16 %v166
    %v571 = vunpack.c.l.b16 %v167
    %v572 = vunpack.c.l.b16 %v168
    %v573 = vunpack.c.l.b16 %v169
    %v574 = vunpack.c.l.b16 %v170
    %v575 = vpack.c.b16 %v468, %v467
    %v576 = vpack.c.b16 %v470, %v469
    %v577 = vpack.c.b16 %v472, %v471
    %v578 = vpack.c.b16 %v474, %v473
    %v579 = vpack.c.b16 %v476, %v475
    %v580 = vpack.c.b16 %v478, %v477
    %v581 = vpack.c.b16 %v480, %v479
    %v582 = vpack.c.b16 %v482, %v481
    %v583 = vpack.c.b16 %v484, %v483
    %v584 = vpack.c.b16 %v486, %v485
    %v585 = vpack.c.b16 %v488, %v487
    %v586 = vpack.c.b16 %v490, %v489
    %v587 = vpack.c.b16 %v492, %v491
    %v588 = vpack.c.b16 %v494, %v493
    %v589 = vpack.c.b16 %v496, %v495
    %v590 = vpack.c.b16 %v498, %v497
    %v591 = vpack.c.b16 %v500, %v499
    %v592 = vpack.c.b16 %v502, %v501
    %v593 = vpack.c.b16 %v504, %v503
    %v594 = vpack.c.b16 %v506, %v505
    %v595 = vpack.c.b16 %v508, %v507
    %v596 = vpack.c.b16 %v510, %v509
    %v597 = vpack.c.b16 %v512, %v511
    %v598 = vpack.c.b16 %v514, %v513
    %v599 = vpack.c.b16 %v516, %v515
    %v600 = vpack.c.b16 %v518, %v517
    %v601 = vpack.c.b16 %v520, %v519
    %v602 = vpack.c.b16 %v522, %v521
    %v603 = vpack.c.b16 %v524, %v523
    %v604 = vpack.c.b16 %v526, %v525
    %v605 = vpack.c.b16 %v528, %v527
    %v606 = vpack.c.b16 %v530, %v529
    %v607 = vpack.c.b16 %v532, %v531
    %v608 = vpack.c.b16 %v534, %v533
    %v609 = vpack.c.b16 %v536, %v535
    %v610 = vpack.c.b16 %v538, %v537
    %v611 = vpack.c.b16 %v540, %v539
    %v612 = vpack.c.b16 %v542, %v541
    %v613 = vpack.c.b16 %v544, %v543
    %v614 = vpack.c.b16 %v546, %v545
    %v615 = vpack.c.b16 %v548, %v547
    %v616 = vpack.c.b16 %v550, %v549
    %v617 = vpack.c.b16 %v552, %v551
    %v618 = vpack.c.b16 %v554, %v553
    %v619 = vpack.c.b16 %v556, %v555
    %v620 = vpack.c.b16 %v558, %v557
    %v621 = vpack.c.b16 %v560, %v559
    %v622 = vpack.c.b16 %v562, %v561
    %v623 = vpack.c.b16 %v564, %v563
    %v624 = vpack.c.b16 %v566, %v565
    %v625 = vpack.c.b16 %v568, %v567
    %v626 = vpack.c.b16 %v570, %v569
    %v627 = vpack.c.b16 %v572, %v571
    %v628 = vpack.c.b16 %v574, %v573
    %vm683 = vcmask 785408
    %v685 = vsel %vm683, %v313, 0
    %v688 = vsel %vm683, %v320, 0
    %v691 = vsel %vm683, %v327, 0
    %v694 = vsel %vm683, %v334, 0
    %696 = vmatprep.subr.bf16.mxu0 0
    %697 = vmatpush1.bf16.msra.mxu0 %v575
    %698 = vmatprep.subr.bf16.mxu0 0
    %699 = vmatpush1.bf16.msra.mxu0 %v576
    %700 = vmatprep.subr.bf16.mxu0 0
    %701 = vmatpush1.bf16.msra.mxu0 %v577
    %702 = vmatprep.subr.bf16.mxu0 0
    %703 = vmatpush1.bf16.msra.mxu0 %v578
    %704 = vmatprep.subr.bf16.mxu0 0
    %705 = vmatpush1.bf16.msra.mxu0 %v579
    %706 = vmatprep.subr.bf16.mxu0 0
    %707 = vmatpush1.bf16.msra.mxu0 %v580
    %708 = vmatprep.subr.bf16.mxu0 0
    %709 = vmatpush1.bf16.msra.mxu0 %v581
    %710 = vmatprep.subr.bf16.mxu0 0
    %711 = vmatpush1.bf16.msra.mxu0 %v582
    %712 = vmatprep.subr.bf16.mxu0 0
    %713 = vmatpush1.bf16.msra.mxu0 %v583
    %714 = vmatprep.subr.bf16.mxu0 0
    %715 = vmatpush1.bf16.msra.mxu0 %v584
    %716 = vmatprep.subr.bf16.mxu0 0
    %717 = vmatpush1.bf16.msra.mxu0 %v585
    %718 = vmatprep.subr.bf16.mxu0 0
    %719 = vmatpush1.bf16.msra.mxu0 %v586
    %720 = vmatprep.subr.bf16.mxu0 0
    %721 = vmatpush1.bf16.msra.mxu0 %v587
    %722 = vmatprep.subr.bf16.mxu0 0
    %723 = vmatpush1.bf16.msra.mxu0 %v588
    %724 = vmatprep.subr.bf16.mxu0 0
    %725 = vmatpush1.bf16.msra.mxu0 %v589
    %726 = vmatprep.subr.bf16.mxu0 0
    %727 = vmatpush1.bf16.msra.mxu0 %v590
    %728 = vmatprep.mubr.bf16.mxu0 %v308
    %729 = vmatmul.mubr.bf16.gmra.mrb[0].mxu0 %v307
    %v730 = vpop.f32.mrb[0].mxu0
    %v731 = vadd.f32 %v182, %v730
    %v732 = vpop.f32.mrb[0].mxu0
    %v733 = vpop.f32.mrb[0].mxu0
    %v734 = vadd.f32 %v187, %v733
    %v735 = vpop.f32.mrb[0].mxu0
    %736 = vmatprep.mubr.bf16.mxu0 %v315
    %737 = vmatmul.mubr.bf16.gmra.mrb[0].mxu0 %v314
    %v738 = vpop.f32.mrb[0].mxu0
    %v739 = vadd.f32 %v192, %v738
    %v740 = vpop.f32.mrb[0].mxu0
    %v741 = vpop.f32.mrb[0].mxu0
    %v742 = vadd.f32 %v197, %v741
    %v743 = vpop.f32.mrb[0].mxu0
    %744 = vmatprep.mubr.bf16.mxu0 %v322
    %745 = vmatmul.mubr.bf16.gmra.mrb[0].mxu0 %v321
    %v746 = vpop.f32.mrb[0].mxu0
    %v747 = vadd.f32 %v202, %v746
    %v748 = vpop.f32.mrb[0].mxu0
    %v749 = vpop.f32.mrb[0].mxu0
    %v750 = vadd.f32 %v207, %v749
    %v751 = vpop.f32.mrb[0].mxu0
    %752 = vmatprep.mubr.bf16.mxu0 %v329
    %753 = vmatmul.mubr.bf16.gmra.mrb[0].mxu0 %v328
    %v754 = vpop.f32.mrb[0].mxu0
    %v755 = vadd.f32 %v212, %v754
    %v756 = vpop.f32.mrb[0].mxu0
    %v757 = vpop.f32.mrb[0].mxu0
    %v758 = vadd.f32 %v217, %v757
    %v759 = vpop.f32.mrb[0].mxu0
    %760 = vdwg.mxu0
    %761 = vmatprep.subr.bf16.mxu0 0
    %762 = vmatpush1.bf16.msra.mxu0 %v591
    %763 = vmatprep.subr.bf16.mxu0 0
    %764 = vmatpush1.bf16.msra.mxu0 %v592
    %765 = vmatprep.subr.bf16.mxu0 0
    %766 = vmatpush1.bf16.msra.mxu0 %v593
    %767 = vmatprep.subr.bf16.mxu0 0
    %768 = vmatpush1.bf16.msra.mxu0 %v594
    %769 = vmatprep.subr.bf16.mxu0 0
    %770 = vmatpush1.bf16.msra.mxu0 %v595
    %771 = vmatprep.subr.bf16.mxu0 0
    %772 = vmatpush1.bf16.msra.mxu0 %v596
    %773 = vmatprep.subr.bf16.mxu0 0
    %774 = vmatpush1.bf16.msra.mxu0 %v597
    %775 = vmatprep.subr.bf16.mxu0 0
    %776 = vmatpush1.bf16.msra.mxu0 %v598
    %777 = vmatprep.subr.bf16.mxu0 0
    %778 = vmatpush1.bf16.msra.mxu0 %v599
    %779 = vmatprep.subr.bf16.mxu0 0
    %780 = vmatpush1.bf16.msra.mxu0 %v600
    %781 = vmatprep.subr.bf16.mxu0 0
    %782 = vmatpush1.bf16.msra.mxu0 %v601
    %783 = vmatprep.subr.bf16.mxu0 0
    %784 = vmatpush1.bf16.msra.mxu0 %v602
    %785 = vmatprep.subr.bf16.mxu0 0
    %786 = vmatpush1.bf16.msra.mxu0 %v603
    %787 = vmatprep.subr.bf16.mxu0 0
    %788 = vmatpush1.bf16.msra.mxu0 %v604
    %789 = vmatprep.subr.bf16.mxu0 0
    %790 = vmatpush1.bf16.msra.mxu0 %v605
    %791 = vmatprep.subr.bf16.mxu0 0
    %792 = vmatpush1.bf16.msra.mxu0 %v606
    %793 = vmatprep.mubr.bf16.mxu0 %v310
    %794 = vmatmul.mubr.bf16.gmra.mrb[0].mxu0 %v309
    %v795 = vpop.f32.mrb[0].mxu0
    %v796 = vadd.f32 %v731, %v795
    %v797 = vpop.f32.mrb[0].mxu0
    %v798 = vpop.f32.mrb[0].mxu0
    %v799 = vadd.f32 %v734, %v798
    %v800 = vpop.f32.mrb[0].mxu0
    %801 = vmatprep.mubr.bf16.mxu0 %v317
    %802 = vmatmul.mubr.bf16.gmra.mrb[0].mxu0 %v316
    %v803 = vpop.f32.mrb[0].mxu0
    %v804 = vadd.f32 %v739, %v803
    %v805 = vpop.f32.mrb[0].mxu0
    %v806 = vpop.f32.mrb[0].mxu0
    %v807 = vadd.f32 %v742, %v806
    %v808 = vpop.f32.mrb[0].mxu0
    %809 = vmatprep.mubr.bf16.mxu0 %v324
    %810 = vmatmul.mubr.bf16.gmra.mrb[0].mxu0 %v323
    %v811 = vpop.f32.mrb[0].mxu0
    %v812 = vadd.f32 %v747, %v811
    %v813 = vpop.f32.mrb[0].mxu0
    %v814 = vpop.f32.mrb[0].mxu0
    %v815 = vadd.f32 %v750, %v814
    %v816 = vpop.f32.mrb[0].mxu0
    %817 = vmatprep.mubr.bf16.mxu0 %v331
    %818 = vmatmul.mubr.bf16.gmra.mrb[0].mxu0 %v330
    %v819 = vpop.f32.mrb[0].mxu0
    %v820 = vadd.f32 %v755, %v819
    %v821 = vpop.f32.mrb[0].mxu0
    %v822 = vpop.f32.mrb[0].mxu0
    %v823 = vadd.f32 %v758, %v822
    %v824 = vpop.f32.mrb[0].mxu0
    %825 = vdwg.mxu0
    %826 = vmatprep.subr.bf16.mxu0 0
    %827 = vmatpush1.bf16.msra.mxu0 %v607
    %828 = vmatprep.subr.bf16.mxu0 0
    %829 = vmatpush1.bf16.msra.mxu0 %v608
    %830 = vmatprep.subr.bf16.mxu0 0
    %831 = vmatpush1.bf16.msra.mxu0 %v609
    %832 = vmatprep.subr.bf16.mxu0 0
    %833 = vmatpush1.bf16.msra.mxu0 %v610
    %834 = vmatprep.subr.bf16.mxu0 0
    %835 = vmatpush1.bf16.msra.mxu0 %v611
    %836 = vmatprep.subr.bf16.mxu0 0
    %837 = vmatpush1.bf16.msra.mxu0 %v612
    %838 = vmatprep.subr.bf16.mxu0 0
    %839 = vmatpush1.bf16.msra.mxu0 %v613
    %840 = vmatprep.subr.bf16.mxu0 0
    %841 = vmatpush1.bf16.msra.mxu0 %v614
    %842 = vmatprep.subr.bf16.mxu0 0
    %843 = vmatpush1.bf16.msra.mxu0 %v615
    %844 = vmatprep.subr.bf16.mxu0 0
    %845 = vmatpush1.bf16.msra.mxu0 %v616
    %846 = vmatprep.subr.bf16.mxu0 0
    %847 = vmatpush1.bf16.msra.mxu0 %v617
    %848 = vmatprep.subr.bf16.mxu0 0
    %849 = vmatpush1.bf16.msra.mxu0 %v618
    %850 = vmatprep.subr.bf16.mxu0 0
    %851 = vmatpush1.bf16.msra.mxu0 %v619
    %852 = vmatprep.subr.bf16.mxu0 0
    %853 = vmatpush1.bf16.msra.mxu0 %v620
    %854 = vmatprep.subr.bf16.mxu0 0
    %855 = vmatpush1.bf16.msra.mxu0 %v621
    %856 = vmatprep.subr.bf16.mxu0 0
    %857 = vmatpush1.bf16.msra.mxu0 %v622
    %858 = vmatprep.mubr.bf16.mxu0 %v312
    %859 = vmatmul.mubr.bf16.gmra.mrb[0].mxu0 %v311
    %v860 = vpop.f32.mrb[0].mxu0
    %v861 = vadd.f32 %v796, %v860
    %v862 = vpop.f32.mrb[0].mxu0
    %v863 = vpop.f32.mrb[0].mxu0
    %v864 = vadd.f32 %v799, %v863
    %v865 = vpop.f32.mrb[0].mxu0
    %866 = vmatprep.mubr.bf16.mxu0 %v319
    %867 = vmatmul.mubr.bf16.gmra.mrb[0].mxu0 %v318
    %v868 = vpop.f32.mrb[0].mxu0
    %v869 = vadd.f32 %v804, %v868
    %v870 = vpop.f32.mrb[0].mxu0
    %v871 = vpop.f32.mrb[0].mxu0
    %v872 = vadd.f32 %v807, %v871
    %v873 = vpop.f32.mrb[0].mxu0
    %874 = vmatprep.mubr.bf16.mxu0 %v326
    %875 = vmatmul.mubr.bf16.gmra.mrb[0].mxu0 %v325
    %v876 = vpop.f32.mrb[0].mxu0
    %v877 = vadd.f32 %v812, %v876
    %v878 = vpop.f32.mrb[0].mxu0
    %v879 = vpop.f32.mrb[0].mxu0
    %v880 = vadd.f32 %v815, %v879
    %v881 = vpop.f32.mrb[0].mxu0
    %882 = vmatprep.mubr.bf16.mxu0 %v333
    %883 = vmatmul.mubr.bf16.gmra.mrb[0].mxu0 %v332
    %v884 = vpop.f32.mrb[0].mxu0
    %v885 = vadd.f32 %v820, %v884
    %v886 = vpop.f32.mrb[0].mxu0
    %v887 = vpop.f32.mrb[0].mxu0
    %v888 = vadd.f32 %v823, %v887
    %v889 = vpop.f32.mrb[0].mxu0
    %890 = vdwg.mxu0
    %891 = vmatprep.subr.bf16.mxu0 0
    %892 = vmatpush1.bf16.msra.mxu0 %v623
    %893 = vmatprep.subr.bf16.mxu0 0
    %894 = vmatpush1.bf16.msra.mxu0 %v624
    %895 = vmatprep.subr.bf16.mxu0 0
    %896 = vmatpush1.bf16.msra.mxu0 %v625
    %897 = vmatprep.subr.bf16.mxu0 0
    %898 = vmatpush1.bf16.msra.mxu0 %v626
    %899 = vmatprep.subr.bf16.mxu0 0
    %900 = vmatpush1.bf16.msra.mxu0 %v627
    %901 = vmatprep.subr.bf16.mxu0 0
    %902 = vmatpush1.bf16.msra.mxu0 %v628
    %903 = vmatprep.subr.bf16.mxu0 0
    %904 = vmatpush1.bf16.msra.mxu0 0
    %905 = vmatprep.subr.bf16.mxu0 0
    %906 = vmatpush1.bf16.msra.mxu0 0
    %907 = vmatprep.subr.bf16.mxu0 0
    %908 = vmatpush1.bf16.msra.mxu0 0
    %909 = vmatprep.subr.bf16.mxu0 0
    %910 = vmatpush1.bf16.msra.mxu0 0
    %911 = vmatprep.subr.bf16.mxu0 0
    %912 = vmatpush1.bf16.msra.mxu0 0
    %913 = vmatprep.subr.bf16.mxu0 0
    %914 = vmatpush1.bf16.msra.mxu0 0
    %915 = vmatprep.subr.bf16.mxu0 0
    %916 = vmatpush1.bf16.msra.mxu0 0
    %917 = vmatprep.subr.bf16.mxu0 0
    %918 = vmatpush1.bf16.msra.mxu0 0
    %919 = vmatprep.subr.bf16.mxu0 0
    %920 = vmatpush1.bf16.msra.mxu0 0
    %921 = vmatprep.subr.bf16.mxu0 0
    %922 = vmatpush1.bf16.msra.mxu0 0
    %923 = vmatprep.mubr.bf16.mxu0 0
    %924 = vmatmul.mubr.bf16.gmra.mrb[0].mxu0 %v685
    %v925 = vpop.f32.mrb[0].mxu0
    %v926 = vadd.f32 %v861, %v925
    %v927 = vpop.f32.mrb[0].mxu0
    %v928 = vpop.f32.mrb[0].mxu0
    %v929 = vadd.f32 %v864, %v928
    %v930 = vpop.f32.mrb[0].mxu0
    %931 = vmatprep.mubr.bf16.mxu0 0
    %932 = vmatmul.mubr.bf16.gmra.mrb[0].mxu0 %v688
    %v933 = vpop.f32.mrb[0].mxu0
    %v934 = vadd.f32 %v869, %v933
    %v935 = vpop.f32.mrb[0].mxu0
    %v936 = vpop.f32.mrb[0].mxu0
    %v937 = vadd.f32 %v872, %v936
    %v938 = vpop.f32.mrb[0].mxu0
    %939 = vmatprep.mubr.bf16.mxu0 0
    %940 = vmatmul.mubr.bf16.gmra.mrb[0].mxu0 %v691
    %v941 = vpop.f32.mrb[0].mxu0
    %v942 = vadd.f32 %v877, %v941
    %v943 = vpop.f32.mrb[0].mxu0
    %v944 = vpop.f32.mrb[0].mxu0
    %v945 = vadd.f32 %v880, %v944
    %v946 = vpop.f32.mrb[0].mxu0
    %947 = vmatprep.mubr.bf16.mxu0 0
    %948 = vmatmul.mubr.bf16.gmra.mrb[0].mxu0 %v694
    %v949 = vpop.f32.mrb[0].mxu0
    %v950 = vadd.f32 %v885, %v949
    %v951 = vpop.f32.mrb[0].mxu0
    %v952 = vpop.f32.mrb[0].mxu0
    %v953 = vadd.f32 %v888, %v952
    %v954 = vpop.f32.mrb[0].mxu0
    %955 = vdwg.mxu0
    %v956 = vmax.f32 %v926, 0.0
    %v957 = vmax.f32 %v929, 0.0
    %v958 = vmax.f32 %v934, 0.0
    %v959 = vmax.f32 %v937, 0.0
    %v960 = vmax.f32 %v942, 0.0
    %v961 = vmax.f32 %v945, 0.0
    %v962 = vmax.f32 %v950, 0.0
    %v963 = vmax.f32 %v953, 0.0
    %s964 = scalar_lea.vmem %s2, 64
    %v965 = vld [vmem:[%s964] sm:$0xff]
    %v966 = vld [vmem:[%s964 + $0x8] sm:$0xff]
    %v967 = vld [vmem:[%s964 + $0x10] sm:$0xff]
    %v968 = vld [vmem:[%s964 + $0x18] sm:$0xff]
    %v969 = vld [vmem:[%s964 + $0x20] sm:$0xff]
    %v970 = vld [vmem:[%s964 + $0x28] sm:$0xff]
    %v971 = vld [vmem:[%s964 + $0x30] sm:$0xff]
    %v972 = vld [vmem:[%s964 + $0x38] sm:$0xff]
    %974 = vset.pattern.permute.xlu0 0
    %975 = vperm.xlu0 %974, %v965
    %v976 = vpop.permute.xlu0 %975
    %979 = vset.pattern.permute.xlu0 0
    %980 = vperm.xlu0 %979, %v966
    %v981 = vpop.permute.xlu0 %980
    %984 = vset.pattern.permute.xlu0 0
    %985 = vperm.xlu0 %984, %v967
    %v986 = vpop.permute.xlu0 %985
    %989 = vset.pattern.permute.xlu0 0
    %990 = vperm.xlu0 %989, %v968
    %v991 = vpop.permute.xlu0 %990
    %994 = vset.pattern.permute.xlu0 0
    %995 = vperm.xlu0 %994, %v969
    %v996 = vpop.permute.xlu0 %995
    %999 = vset.pattern.permute.xlu0 0
    %1000 = vperm.xlu0 %999, %v970
    %v1001 = vpop.permute.xlu0 %1000
    %1004 = vset.pattern.permute.xlu0 0
    %1005 = vperm.xlu0 %1004, %v971
    %v1006 = vpop.permute.xlu0 %1005
    %1009 = vset.pattern.permute.xlu0 0
    %1010 = vperm.xlu0 %1009, %v972
    %v1011 = vpop.permute.xlu0 %1010
    %v1013 = vmul.f32 %v956, %v976
    %v1014 = vmul.f32 %v957, %v981
    %v1015 = vmul.f32 %v958, %v986
    %v1016 = vmul.f32 %v959, %v991
    %v1017 = vmul.f32 %v960, %v996
    %v1018 = vmul.f32 %v961, %v1001
    %v1019 = vmul.f32 %v962, %v1006
    %v1020 = vmul.f32 %v963, %v1011
    %s1021 = scalar_lea.vmem %s2, 128
    %v1022 = vld [vmem:[%s1021] sm:$0xff]
    %v1023 = vld [vmem:[%s1021 + $0x8] sm:$0xff]
    %v1024 = vld [vmem:[%s1021 + $0x10] sm:$0xff]
    %v1025 = vld [vmem:[%s1021 + $0x18] sm:$0xff]
    %v1026 = vld [vmem:[%s1021 + $0x20] sm:$0xff]
    %v1027 = vld [vmem:[%s1021 + $0x28] sm:$0xff]
    %v1028 = vld [vmem:[%s1021 + $0x30] sm:$0xff]
    %v1029 = vld [vmem:[%s1021 + $0x38] sm:$0xff]
    %1031 = vset.pattern.permute.xlu0 0
    %1032 = vperm.xlu0 %1031, %v1022
    %v1033 = vpop.permute.xlu0 %1032
    %1036 = vset.pattern.permute.xlu0 0
    %1037 = vperm.xlu0 %1036, %v1023
    %v1038 = vpop.permute.xlu0 %1037
    %1041 = vset.pattern.permute.xlu0 0
    %1042 = vperm.xlu0 %1041, %v1024
    %v1043 = vpop.permute.xlu0 %1042
    %1046 = vset.pattern.permute.xlu0 0
    %1047 = vperm.xlu0 %1046, %v1025
    %v1048 = vpop.permute.xlu0 %1047
    %1051 = vset.pattern.permute.xlu0 0
    %1052 = vperm.xlu0 %1051, %v1026
    %v1053 = vpop.permute.xlu0 %1052
    %1056 = vset.pattern.permute.xlu0 0
    %1057 = vperm.xlu0 %1056, %v1027
    %v1058 = vpop.permute.xlu0 %1057
    %1061 = vset.pattern.permute.xlu0 0
    %1062 = vperm.xlu0 %1061, %v1028
    %v1063 = vpop.permute.xlu0 %1062
    %1066 = vset.pattern.permute.xlu0 0
    %1067 = vperm.xlu0 %1066, %v1029
    %v1068 = vpop.permute.xlu0 %1067
    %v1070 = vadd.f32 %v1013, %v1033
    %v1071 = vadd.f32 %v1014, %v1038
    %v1072 = vadd.f32 %v1015, %v1043
    %v1073 = vadd.f32 %v1016, %v1048
    %v1074 = vadd.f32 %v1017, %v1053
    %v1075 = vadd.f32 %v1018, %v1058
    %v1076 = vadd.f32 %v1019, %v1063
    %v1077 = vadd.f32 %v1020, %v1068
    %v1078 = vld [vmem:[%s3] sm:$0xff]
    %v1079 = vld [vmem:[%s3 + $0x8] sm:$0xff]
    %vm1080 = vcmask 130048
    %v1082 = vsel %vm1080, %v1070, 0
    %v1085 = vsel %vm1080, %v1071, 0
    %v1088 = vsel %vm1080, %v1072, 0
    %v1091 = vsel %vm1080, %v1073, 0
    %v1094 = vsel %vm1080, %v1074, 0
    %v1097 = vsel %vm1080, %v1075, 0
    %v1100 = vsel %vm1080, %v1076, 0
    %v1103 = vsel %vm1080, %v1077, 0
    %1105 = vmatprep.subr.mxu0 0.0
    %1106 = vmatpush1.msra.mxu0 %v1078
    %1107 = vmatprep.subr.mxu0 0.0
    %1108 = vmatpush1.msra.mxu0 %v1079
    %1109 = vmatprep.subr.mxu0 0.0
    %1110 = vmatpush1.msra.mxu0 0.0
    %1111 = vmatprep.subr.mxu0 0.0
    %1112 = vmatpush1.msra.mxu0 0.0
    %1113 = vmatprep.subr.mxu0 0.0
    %1114 = vmatpush1.msra.mxu0 0.0
    %1115 = vmatprep.subr.mxu0 0.0
    %1116 = vmatpush1.msra.mxu0 0.0
    %1117 = vmatprep.subr.mxu0 0.0
    %1118 = vmatpush1.msra.mxu0 0.0
    %1119 = vmatprep.subr.mxu0 0.0
    %1120 = vmatpush1.msra.mxu0 0.0
    %1121 = vmatprep.subr.mxu0 0.0
    %1122 = vmatpush1.msra.mxu0 0.0
    %1123 = vmatprep.subr.mxu0 0.0
    %1124 = vmatpush1.msra.mxu0 0.0
    %1125 = vmatprep.subr.mxu0 0.0
    %1126 = vmatpush1.msra.mxu0 0.0
    %1127 = vmatprep.subr.mxu0 0.0
    %1128 = vmatpush1.msra.mxu0 0.0
    %1129 = vmatprep.subr.mxu0 0.0
    %1130 = vmatpush1.msra.mxu0 0.0
    %1131 = vmatprep.subr.mxu0 0.0
    %1132 = vmatpush1.msra.mxu0 0.0
    %1133 = vmatprep.subr.mxu0 0.0
    %1134 = vmatpush1.msra.mxu0 0.0
    %1135 = vmatprep.subr.mxu0 0.0
    %1136 = vmatpush1.msra.mxu0 0.0
    %1137 = vmatprep.subr.mxu0 0.0
    %1138 = vmatpush1.msra.mxu0 0.0
    %1139 = vmatprep.subr.mxu0 0.0
    %1140 = vmatpush1.msra.mxu0 0.0
    %1141 = vmatprep.subr.mxu0 0.0
    %1142 = vmatpush1.msra.mxu0 0.0
    %1143 = vmatprep.subr.mxu0 0.0
    %1144 = vmatpush1.msra.mxu0 0.0
    %1145 = vmatprep.subr.mxu0 0.0
    %1146 = vmatpush1.msra.mxu0 0.0
    %1147 = vmatprep.subr.mxu0 0.0
    %1148 = vmatpush1.msra.mxu0 0.0
    %1149 = vmatprep.subr.mxu0 0.0
    %1150 = vmatpush1.msra.mxu0 0.0
    %1151 = vmatprep.subr.mxu0 0.0
    %1152 = vmatpush1.msra.mxu0 0.0
    %1153 = vmatprep.subr.mxu0 0.0
    %1154 = vmatpush1.msra.mxu0 0.0
    %1155 = vmatprep.subr.mxu0 0.0
    %1156 = vmatpush1.msra.mxu0 0.0
    %1157 = vmatprep.subr.mxu0 0.0
    %1158 = vmatpush1.msra.mxu0 0.0
    %1159 = vmatprep.subr.mxu0 0.0
    %1160 = vmatpush1.msra.mxu0 0.0
    %1161 = vmatprep.subr.mxu0 0.0
    %1162 = vmatpush1.msra.mxu0 0.0
    %1163 = vmatprep.subr.mxu0 0.0
    %1164 = vmatpush1.msra.mxu0 0.0
    %1165 = vmatprep.subr.mxu0 0.0
    %1166 = vmatpush1.msra.mxu0 0.0
    %1167 = vmatprep.subr.mxu0 0.0
    %1168 = vmatpush1.msra.mxu0 0.0
    %1169 = vmatprep.mubr.f32.mxu0 0.0
    %1170 = vmatmul.mubr.f32.gmra.mrb[0].mxu0 %v1082
    %v1171 = vpop.f32.mrb[0].mxu0
    %v1172 = vadd.f32 0.0, %v1171
    %v1173 = vpop.f32.mrb[0].mxu0
    %1174 = vmatprep.mubr.f32.mxu0 0.0
    %1175 = vmatmul.mubr.f32.gmra.mrb[0].mxu0 %v1085
    %v1176 = vpop.f32.mrb[0].mxu0
    %v1177 = vadd.f32 0.0, %v1176
    %v1178 = vpop.f32.mrb[0].mxu0
    %1179 = vmatprep.mubr.f32.mxu0 0.0
    %1180 = vmatmul.mubr.f32.gmra.mrb[0].mxu0 %v1088
    %v1181 = vpop.f32.mrb[0].mxu0
    %v1182 = vadd.f32 0.0, %v1181
    %v1183 = vpop.f32.mrb[0].mxu0
    %1184 = vmatprep.mubr.f32.mxu0 0.0
    %1185 = vmatmul.mubr.f32.gmra.mrb[0].mxu0 %v1091
    %v1186 = vpop.f32.mrb[0].mxu0
    %v1187 = vadd.f32 0.0, %v1186
    %v1188 = vpop.f32.mrb[0].mxu0
    %1189 = vmatprep.mubr.f32.mxu0 0.0
    %1190 = vmatmul.mubr.f32.gmra.mrb[0].mxu0 %v1094
    %v1191 = vpop.f32.mrb[0].mxu0
    %v1192 = vadd.f32 0.0, %v1191
    %v1193 = vpop.f32.mrb[0].mxu0
    %1194 = vmatprep.mubr.f32.mxu0 0.0
    %1195 = vmatmul.mubr.f32.gmra.mrb[0].mxu0 %v1097
    %v1196 = vpop.f32.mrb[0].mxu0
    %v1197 = vadd.f32 0.0, %v1196
    %v1198 = vpop.f32.mrb[0].mxu0
    %1199 = vmatprep.mubr.f32.mxu0 0.0
    %1200 = vmatmul.mubr.f32.gmra.mrb[0].mxu0 %v1100
    %v1201 = vpop.f32.mrb[0].mxu0
    %v1202 = vadd.f32 0.0, %v1201
    %v1203 = vpop.f32.mrb[0].mxu0
    %1204 = vmatprep.mubr.f32.mxu0 0.0
    %1205 = vmatmul.mubr.f32.gmra.mrb[0].mxu0 %v1103
    %v1206 = vpop.f32.mrb[0].mxu0
    %v1207 = vadd.f32 0.0, %v1206
    %v1208 = vpop.f32.mrb[0].mxu0
    %1209 = vdwg.mxu0
    %v1210 = vld [vmem:[%s4] sm:$0xf]
    %v1211 = vld [vmem:[%s4 + $0x4] sm:$0xf]
    %v1212 = vld [vmem:[%s4 + $0x8] sm:$0xf]
    %v1213 = vld [vmem:[%s4 + $0xc] sm:$0xf]
    %v1214 = vld [vmem:[%s4 + $0x10] sm:$0xf]
    %v1215 = vld [vmem:[%s4 + $0x14] sm:$0xf]
    %v1216 = vld [vmem:[%s4 + $0x18] sm:$0xf]
    %v1217 = vld [vmem:[%s4 + $0x1c] sm:$0xf]
    %v1218 = vld [vmem:[%s4 + $0x20] sm:$0xf]
    %v1219 = vld [vmem:[%s4 + $0x24] sm:$0xf]
    %v1220 = vld [vmem:[%s4 + $0x28] sm:$0xf]
    %v1221 = vld [vmem:[%s4 + $0x2c] sm:$0xf]
    %v1222 = vld [vmem:[%s4 + $0x30] sm:$0xf]
    %v1223 = vld [vmem:[%s4 + $0x34] sm:$0xf]
    %v1224 = vld [vmem:[%s4 + $0x38] sm:$0xf]
    %v1225 = vld [vmem:[%s4 + $0x3c] sm:$0xf]
    %v1226 = vpack.c.bf16 %v1177, %v1172
    %v1227 = vpack.c.bf16 %v1187, %v1182
    %v1228 = vpack.c.bf16 %v1197, %v1192
    %v1229 = vpack.c.bf16 %v1207, %v1202
    %v1230 = vld [vmem:[%s7] sm:$0xff]
    %v1231 = vld [vmem:[%s7 + $0x8] sm:$0xff]
    %v1232 = vld [vmem:[%s7 + $0x10] sm:$0xff]
    %v1233 = vld [vmem:[%s7 + $0x18] sm:$0xff]
    %v1234 = vld [vmem:[%s7 + $0x20] sm:$0xff]
    %v1235 = vld [vmem:[%s7 + $0x28] sm:$0xff]
    %v1236 = vld [vmem:[%s7 + $0x30] sm:$0xff]
    %v1237 = vld [vmem:[%s7 + $0x38] sm:$0xff]
    %v1238 = vld [vmem:[%s7 + $0x40] sm:$0xff]
    %v1239 = vld [vmem:[%s7 + $0x48] sm:$0xff]
    %v1240 = vld [vmem:[%s7 + $0x50] sm:$0xff]
    %v1241 = vld [vmem:[%s7 + $0x58] sm:$0xff]
    %v1242 = vld [vmem:[%s7 + $0x60] sm:$0xff]
    %v1243 = vld [vmem:[%s7 + $0x68] sm:$0xff]
    %v1244 = vld [vmem:[%s7 + $0x70] sm:$0xff]
    %v1245 = vld [vmem:[%s7 + $0x78] sm:$0xff]
    %1247 = vset.pattern.permute.xlu0 0
    %1248 = vperm.xlu0 %1247, %v1230
    %v1249 = vpop.permute.xlu0 %1248
    %1252 = vset.pattern.permute.xlu0 0
    %1253 = vperm.xlu0 %1252, %v1231
    %v1254 = vpop.permute.xlu0 %1253
    %1257 = vset.pattern.permute.xlu0 0
    %1258 = vperm.xlu0 %1257, %v1232
    %v1259 = vpop.permute.xlu0 %1258
    %1262 = vset.pattern.permute.xlu0 0
    %1263 = vperm.xlu0 %1262, %v1233
    %v1264 = vpop.permute.xlu0 %1263
    %1267 = vset.pattern.permute.xlu0 0
    %1268 = vperm.xlu0 %1267, %v1234
    %v1269 = vpop.permute.xlu0 %1268
    %1272 = vset.pattern.permute.xlu0 0
    %1273 = vperm.xlu0 %1272, %v1235
    %v1274 = vpop.permute.xlu0 %1273
    %1277 = vset.pattern.permute.xlu0 0
    %1278 = vperm.xlu0 %1277, %v1236
    %v1279 = vpop.permute.xlu0 %1278
    %1282 = vset.pattern.permute.xlu0 0
    %1283 = vperm.xlu0 %1282, %v1237
    %v1284 = vpop.permute.xlu0 %1283
    %1287 = vset.pattern.permute.xlu0 0
    %1288 = vperm.xlu0 %1287, %v1238
    %v1289 = vpop.permute.xlu0 %1288
    %1292 = vset.pattern.permute.xlu0 0
    %1293 = vperm.xlu0 %1292, %v1239
    %v1294 = vpop.permute.xlu0 %1293
    %1297 = vset.pattern.permute.xlu0 0
    %1298 = vperm.xlu0 %1297, %v1240
    %v1299 = vpop.permute.xlu0 %1298
    %1302 = vset.pattern.permute.xlu0 0
    %1303 = vperm.xlu0 %1302, %v1241
    %v1304 = vpop.permute.xlu0 %1303
    %1307 = vset.pattern.permute.xlu0 0
    %1308 = vperm.xlu0 %1307, %v1242
    %v1309 = vpop.permute.xlu0 %1308
    %1312 = vset.pattern.permute.xlu0 0
    %1313 = vperm.xlu0 %1312, %v1243
    %v1314 = vpop.permute.xlu0 %1313
    %1317 = vset.pattern.permute.xlu0 0
    %1318 = vperm.xlu0 %1317, %v1244
    %v1319 = vpop.permute.xlu0 %1318
    %1322 = vset.pattern.permute.xlu0 0
    %1323 = vperm.xlu0 %1322, %v1245
    %v1324 = vpop.permute.xlu0 %1323
    %v1342 = vunpack.c.l.b16 %v1210
    %v1343 = vunpack.c.l.b16 %v1211
    %v1344 = vunpack.c.l.b16 %v1212
    %v1345 = vunpack.c.l.b16 %v1213
    %v1346 = vunpack.c.l.b16 %v1214
    %v1347 = vunpack.c.l.b16 %v1215
    %v1348 = vunpack.c.l.b16 %v1216
    %v1349 = vunpack.c.l.b16 %v1217
    %v1350 = vunpack.c.l.b16 %v1218
    %v1351 = vunpack.c.l.b16 %v1219
    %v1352 = vunpack.c.l.b16 %v1220
    %v1353 = vunpack.c.l.b16 %v1221
    %v1354 = vunpack.c.l.b16 %v1222
    %v1355 = vunpack.c.l.b16 %v1223
    %v1356 = vunpack.c.l.b16 %v1224
    %v1357 = vunpack.c.l.b16 %v1225
    %v1358 = vpack.c.b16 %v1343, %v1342
    %v1359 = vpack.c.b16 %v1345, %v1344
    %v1360 = vpack.c.b16 %v1347, %v1346
    %v1361 = vpack.c.b16 %v1349, %v1348
    %v1362 = vpack.c.b16 %v1351, %v1350
    %v1363 = vpack.c.b16 %v1353, %v1352
    %v1364 = vpack.c.b16 %v1355, %v1354
    %v1365 = vpack.c.b16 %v1357, %v1356
    %vm1366 = vcmask 523264
    %v1368 = vsel %vm1366, %v1358, 0
    %v1371 = vsel %vm1366, %v1359, 0
    %v1374 = vsel %vm1366, %v1360, 0
    %v1377 = vsel %vm1366, %v1361, 0
    %v1380 = vsel %vm1366, %v1362, 0
    %v1383 = vsel %vm1366, %v1363, 0
    %v1386 = vsel %vm1366, %v1364, 0
    %v1389 = vsel %vm1366, %v1365, 0
    %1391 = vmatprep.subr.bf16.mxu0 0
    %1392 = vmatpush1.bf16.msra.mxu0 %v1226
    %1393 = vmatprep.subr.bf16.mxu0 0
    %1394 = vmatpush1.bf16.msra.mxu0 %v1227
    %1395 = vmatprep.subr.bf16.mxu0 0
    %1396 = vmatpush1.bf16.msra.mxu0 %v1228
    %1397 = vmatprep.subr.bf16.mxu0 0
    %1398 = vmatpush1.bf16.msra.mxu0 %v1229
    %1399 = vmatprep.subr.bf16.mxu0 0
    %1400 = vmatpush1.bf16.msra.mxu0 0
    %1401 = vmatprep.subr.bf16.mxu0 0
    %1402 = vmatpush1.bf16.msra.mxu0 0
    %1403 = vmatprep.subr.bf16.mxu0 0
    %1404 = vmatpush1.bf16.msra.mxu0 0
    %1405 = vmatprep.subr.bf16.mxu0 0
    %1406 = vmatpush1.bf16.msra.mxu0 0
    %1407 = vmatprep.subr.bf16.mxu0 0
    %1408 = vmatpush1.bf16.msra.mxu0 0
    %1409 = vmatprep.subr.bf16.mxu0 0
    %1410 = vmatpush1.bf16.msra.mxu0 0
    %1411 = vmatprep.subr.bf16.mxu0 0
    %1412 = vmatpush1.bf16.msra.mxu0 0
    %1413 = vmatprep.subr.bf16.mxu0 0
    %1414 = vmatpush1.bf16.msra.mxu0 0
    %1415 = vmatprep.subr.bf16.mxu0 0
    %1416 = vmatpush1.bf16.msra.mxu0 0
    %1417 = vmatprep.subr.bf16.mxu0 0
    %1418 = vmatpush1.bf16.msra.mxu0 0
    %1419 = vmatprep.subr.bf16.mxu0 0
    %1420 = vmatpush1.bf16.msra.mxu0 0
    %1421 = vmatprep.subr.bf16.mxu0 0
    %1422 = vmatpush1.bf16.msra.mxu0 0
    %1423 = vmatprep.mubr.bf16.mxu0 0
    %1424 = vmatmul.mubr.bf16.gmra.mrb[0].mxu0 %v1368
    %v1425 = vpop.f32.mrb[0].mxu0
    %v1426 = vadd.f32 %v1249, %v1425
    %v1427 = vpop.f32.mrb[0].mxu0
    %v1428 = vpop.f32.mrb[0].mxu0
    %v1429 = vadd.f32 %v1254, %v1428
    %v1430 = vpop.f32.mrb[0].mxu0
    %1431 = vmatprep.mubr.bf16.mxu0 0
    %1432 = vmatmul.mubr.bf16.gmra.mrb[0].mxu0 %v1371
    %v1433 = vpop.f32.mrb[0].mxu0
    %v1434 = vadd.f32 %v1259, %v1433
    %v1435 = vpop.f32.mrb[0].mxu0
    %v1436 = vpop.f32.mrb[0].mxu0
    %v1437 = vadd.f32 %v1264, %v1436
    %v1438 = vpop.f32.mrb[0].mxu0
    %1439 = vmatprep.mubr.bf16.mxu0 0
    %1440 = vmatmul.mubr.bf16.gmra.mrb[0].mxu0 %v1374
    %v1441 = vpop.f32.mrb[0].mxu0
    %v1442 = vadd.f32 %v1269, %v1441
    %v1443 = vpop.f32.mrb[0].mxu0
    %v1444 = vpop.f32.mrb[0].mxu0
    %v1445 = vadd.f32 %v1274, %v1444
    %v1446 = vpop.f32.mrb[0].mxu0
    %1447 = vmatprep.mubr.bf16.mxu0 0
    %1448 = vmatmul.mubr.bf16.gmra.mrb[0].mxu0 %v1377
    %v1449 = vpop.f32.mrb[0].mxu0
    %v1450 = vadd.f32 %v1279, %v1449
    %v1451 = vpop.f32.mrb[0].mxu0
    %v1452 = vpop.f32.mrb[0].mxu0
    %v1453 = vadd.f32 %v1284, %v1452
    %v1454 = vpop.f32.mrb[0].mxu0
    %1455 = vmatprep.mubr.bf16.mxu0 0
    %1456 = vmatmul.mubr.bf16.gmra.mrb[0].mxu0 %v1380
    %v1457 = vpop.f32.mrb[0].mxu0
    %v1458 = vadd.f32 %v1289, %v1457
    %v1459 = vpop.f32.mrb[0].mxu0
    %v1460 = vpop.f32.mrb[0].mxu0
    %v1461 = vadd.f32 %v1294, %v1460
    %v1462 = vpop.f32.mrb[0].mxu0
    %1463 = vmatprep.mubr.bf16.mxu0 0
    %1464 = vmatmul.mubr.bf16.gmra.mrb[0].mxu0 %v1383
    %v1465 = vpop.f32.mrb[0].mxu0
    %v1466 = vadd.f32 %v1299, %v1465
    %v1467 = vpop.f32.mrb[0].mxu0
    %v1468 = vpop.f32.mrb[0].mxu0
    %v1469 = vadd.f32 %v1304, %v1468
    %v1470 = vpop.f32.mrb[0].mxu0
    %1471 = vmatprep.mubr.bf16.mxu0 0
    %1472 = vmatmul.mubr.bf16.gmra.mrb[0].mxu0 %v1386
    %v1473 = vpop.f32.mrb[0].mxu0
    %v1474 = vadd.f32 %v1309, %v1473
    %v1475 = vpop.f32.mrb[0].mxu0
    %v1476 = vpop.f32.mrb[0].mxu0
    %v1477 = vadd.f32 %v1314, %v1476
    %v1478 = vpop.f32.mrb[0].mxu0
    %1479 = vmatprep.mubr.bf16.mxu0 0
    %1480 = vmatmul.mubr.bf16.gmra.mrb[0].mxu0 %v1389
    %v1481 = vpop.f32.mrb[0].mxu0
    %v1482 = vadd.f32 %v1319, %v1481
    %v1483 = vpop.f32.mrb[0].mxu0
    %v1484 = vpop.f32.mrb[0].mxu0
    %v1485 = vadd.f32 %v1324, %v1484
    %v1486 = vpop.f32.mrb[0].mxu0
    %1487 = vdwg.mxu0
    %v1488 = vmax.f32 %v1426, 0.0
    %v1489 = vmax.f32 %v1429, 0.0
    %v1490 = vmax.f32 %v1434, 0.0
    %v1491 = vmax.f32 %v1437, 0.0
    %v1492 = vmax.f32 %v1442, 0.0
    %v1493 = vmax.f32 %v1445, 0.0
    %v1494 = vmax.f32 %v1450, 0.0
    %v1495 = vmax.f32 %v1453, 0.0
    %v1496 = vmax.f32 %v1458, 0.0
    %v1497 = vmax.f32 %v1461, 0.0
    %v1498 = vmax.f32 %v1466, 0.0
    %v1499 = vmax.f32 %v1469, 0.0
    %v1500 = vmax.f32 %v1474, 0.0
    %v1501 = vmax.f32 %v1477, 0.0
    %v1502 = vmax.f32 %v1482, 0.0
    %v1503 = vmax.f32 %v1485, 0.0
    %v1504 = vld [vmem:[%s5] sm:$0xf]
    %v1505 = vld [vmem:[%s5 + $0x4] sm:$0xf]
    %v1506 = vld [vmem:[%s5 + $0x8] sm:$0xf]
    %v1507 = vld [vmem:[%s5 + $0xc] sm:$0xf]
    %v1508 = vld [vmem:[%s5 + $0x10] sm:$0xf]
    %v1509 = vld [vmem:[%s5 + $0x14] sm:$0xf]
    %v1510 = vld [vmem:[%s5 + $0x18] sm:$0xf]
    %v1511 = vld [vmem:[%s5 + $0x1c] sm:$0xf]
    %v1512 = vld [vmem:[%s5 + $0x20] sm:$0xf]
    %v1513 = vld [vmem:[%s5 + $0x24] sm:$0xf]
    %v1514 = vld [vmem:[%s5 + $0x28] sm:$0xf]
    %v1515 = vld [vmem:[%s5 + $0x2c] sm:$0xf]
    %v1516 = vld [vmem:[%s5 + $0x30] sm:$0xf]
    %v1517 = vld [vmem:[%s5 + $0x34] sm:$0xf]
    %v1518 = vld [vmem:[%s5 + $0x38] sm:$0xf]
    %v1519 = vld [vmem:[%s5 + $0x3c] sm:$0xf]
    %v1520 = vpack.c.bf16 %v1489, %v1488
    %v1521 = vpack.c.bf16 %v1491, %v1490
    %v1522 = vpack.c.bf16 %v1493, %v1492
    %v1523 = vpack.c.bf16 %v1495, %v1494
    %v1524 = vpack.c.bf16 %v1497, %v1496
    %v1525 = vpack.c.bf16 %v1499, %v1498
    %v1526 = vpack.c.bf16 %v1501, %v1500
    %v1527 = vpack.c.bf16 %v1503, %v1502
    %s1528 = scalar_lea.vmem %s7, 128
    %v1529 = vld [vmem:[%s1528] sm:$0xff]
    %v1530 = vld [vmem:[%s1528 + $0x8] sm:$0xff]
    %v1531 = vld [vmem:[%s1528 + $0x10] sm:$0xff]
    %v1532 = vld [vmem:[%s1528 + $0x18] sm:$0xff]
    %v1533 = vld [vmem:[%s1528 + $0x20] sm:$0xff]
    %v1534 = vld [vmem:[%s1528 + $0x28] sm:$0xff]
    %v1535 = vld [vmem:[%s1528 + $0x30] sm:$0xff]
    %v1536 = vld [vmem:[%s1528 + $0x38] sm:$0xff]
    %v1537 = vld [vmem:[%s1528 + $0x40] sm:$0xff]
    %v1538 = vld [vmem:[%s1528 + $0x48] sm:$0xff]
    %v1539 = vld [vmem:[%s1528 + $0x50] sm:$0xff]
    %v1540 = vld [vmem:[%s1528 + $0x58] sm:$0xff]
    %v1541 = vld [vmem:[%s1528 + $0x60] sm:$0xff]
    %v1542 = vld [vmem:[%s1528 + $0x68] sm:$0xff]
    %v1543 = vld [vmem:[%s1528 + $0x70] sm:$0xff]
    %v1544 = vld [vmem:[%s1528 + $0x78] sm:$0xff]
    %1546 = vset.pattern.permute.xlu0 0
    %1547 = vperm.xlu0 %1546, %v1529
    %v1548 = vpop.permute.xlu0 %1547
    %1551 = vset.pattern.permute.xlu0 0
    %1552 = vperm.xlu0 %1551, %v1530
    %v1553 = vpop.permute.xlu0 %1552
    %1556 = vset.pattern.permute.xlu0 0
    %1557 = vperm.xlu0 %1556, %v1531
    %v1558 = vpop.permute.xlu0 %1557
    %1561 = vset.pattern.permute.xlu0 0
    %1562 = vperm.xlu0 %1561, %v1532
    %v1563 = vpop.permute.xlu0 %1562
    %1566 = vset.pattern.permute.xlu0 0
    %1567 = vperm.xlu0 %1566, %v1533
    %v1568 = vpop.permute.xlu0 %1567
    %1571 = vset.pattern.permute.xlu0 0
    %1572 = vperm.xlu0 %1571, %v1534
    %v1573 = vpop.permute.xlu0 %1572
    %1576 = vset.pattern.permute.xlu0 0
    %1577 = vperm.xlu0 %1576, %v1535
    %v1578 = vpop.permute.xlu0 %1577
    %1581 = vset.pattern.permute.xlu0 0
    %1582 = vperm.xlu0 %1581, %v1536
    %v1583 = vpop.permute.xlu0 %1582
    %1586 = vset.pattern.permute.xlu0 0
    %1587 = vperm.xlu0 %1586, %v1537
    %v1588 = vpop.permute.xlu0 %1587
    %1591 = vset.pattern.permute.xlu0 0
    %1592 = vperm.xlu0 %1591, %v1538
    %v1593 = vpop.permute.xlu0 %1592
    %1596 = vset.pattern.permute.xlu0 0
    %1597 = vperm.xlu0 %1596, %v1539
    %v1598 = vpop.permute.xlu0 %1597
    %1601 = vset.pattern.permute.xlu0 0
    %1602 = vperm.xlu0 %1601, %v1540
    %v1603 = vpop.permute.xlu0 %1602
    %1606 = vset.pattern.permute.xlu0 0
    %1607 = vperm.xlu0 %1606, %v1541
    %v1608 = vpop.permute.xlu0 %1607
    %1611 = vset.pattern.permute.xlu0 0
    %1612 = vperm.xlu0 %1611, %v1542
    %v1613 = vpop.permute.xlu0 %1612
    %1616 = vset.pattern.permute.xlu0 0
    %1617 = vperm.xlu0 %1616, %v1543
    %v1618 = vpop.permute.xlu0 %1617
    %1621 = vset.pattern.permute.xlu0 0
    %1622 = vperm.xlu0 %1621, %v1544
    %v1623 = vpop.permute.xlu0 %1622
    %v1641 = vunpack.c.l.b16 %v1504
    %v1642 = vunpack.c.l.b16 %v1505
    %v1643 = vunpack.c.l.b16 %v1506
    %v1644 = vunpack.c.l.b16 %v1507
    %v1645 = vunpack.c.l.b16 %v1508
    %v1646 = vunpack.c.l.b16 %v1509
    %v1647 = vunpack.c.l.b16 %v1510
    %v1648 = vunpack.c.l.b16 %v1511
    %v1649 = vunpack.c.l.b16 %v1512
    %v1650 = vunpack.c.l.b16 %v1513
    %v1651 = vunpack.c.l.b16 %v1514
    %v1652 = vunpack.c.l.b16 %v1515
    %v1653 = vunpack.c.l.b16 %v1516
    %v1654 = vunpack.c.l.b16 %v1517
    %v1655 = vunpack.c.l.b16 %v1518
    %v1656 = vunpack.c.l.b16 %v1519
    %v1657 = vpack.c.b16 %v1642, %v1641
    %v1658 = vpack.c.b16 %v1644, %v1643
    %v1659 = vpack.c.b16 %v1646, %v1645
    %v1660 = vpack.c.b16 %v1648, %v1647
    %v1661 = vpack.c.b16 %v1650, %v1649
    %v1662 = vpack.c.b16 %v1652, %v1651
    %v1663 = vpack.c.b16 %v1654, %v1653
    %v1664 = vpack.c.b16 %v1656, %v1655
    %1673 = vmatprep.subr.bf16.mxu0 0
    %1674 = vmatpush1.bf16.msra.mxu0 %v1520
    %1675 = vmatprep.subr.bf16.mxu0 0
    %1676 = vmatpush1.bf16.msra.mxu0 %v1521
    %1677 = vmatprep.subr.bf16.mxu0 0
    %1678 = vmatpush1.bf16.msra.mxu0 %v1522
    %1679 = vmatprep.subr.bf16.mxu0 0
    %1680 = vmatpush1.bf16.msra.mxu0 %v1523
    %1681 = vmatprep.subr.bf16.mxu0 0
    %1682 = vmatpush1.bf16.msra.mxu0 %v1524
    %1683 = vmatprep.subr.bf16.mxu0 0
    %1684 = vmatpush1.bf16.msra.mxu0 %v1525
    %1685 = vmatprep.subr.bf16.mxu0 0
    %1686 = vmatpush1.bf16.msra.mxu0 %v1526
    %1687 = vmatprep.subr.bf16.mxu0 0
    %1688 = vmatpush1.bf16.msra.mxu0 %v1527
    %1689 = vmatprep.subr.bf16.mxu0 0
    %1690 = vmatpush1.bf16.msra.mxu0 0
    %1691 = vmatprep.subr.bf16.mxu0 0
    %1692 = vmatpush1.bf16.msra.mxu0 0
    %1693 = vmatprep.subr.bf16.mxu0 0
    %1694 = vmatpush1.bf16.msra.mxu0 0
    %1695 = vmatprep.subr.bf16.mxu0 0
    %1696 = vmatpush1.bf16.msra.mxu0 0
    %1697 = vmatprep.subr.bf16.mxu0 0
    %1698 = vmatpush1.bf16.msra.mxu0 0
    %1699 = vmatprep.subr.bf16.mxu0 0
    %1700 = vmatpush1.bf16.msra.mxu0 0
    %1701 = vmatprep.subr.bf16.mxu0 0
    %1702 = vmatpush1.bf16.msra.mxu0 0
    %1703 = vmatprep.subr.bf16.mxu0 0
    %1704 = vmatpush1.bf16.msra.mxu0 0
    %1705 = vmatprep.mubr.bf16.mxu0 0
    %1706 = vmatmul.mubr.bf16.gmra.mrb[0].mxu0 %v1657
    %v1707 = vpop.f32.mrb[0].mxu0
    %v1708 = vadd.f32 %v1548, %v1707
    %v1709 = vpop.f32.mrb[0].mxu0
    %v1710 = vpop.f32.mrb[0].mxu0
    %v1711 = vadd.f32 %v1553, %v1710
    %v1712 = vpop.f32.mrb[0].mxu0
    %1713 = vmatprep.mubr.bf16.mxu0 0
    %1714 = vmatmul.mubr.bf16.gmra.mrb[0].mxu0 %v1658
    %v1715 = vpop.f32.mrb[0].mxu0
    %v1716 = vadd.f32 %v1558, %v1715
    %v1717 = vpop.f32.mrb[0].mxu0
    %v1718 = vpop.f32.mrb[0].mxu0
    %v1719 = vadd.f32 %v1563, %v1718
    %v1720 = vpop.f32.mrb[0].mxu0
    %1721 = vmatprep.mubr.bf16.mxu0 0
    %1722 = vmatmul.mubr.bf16.gmra.mrb[0].mxu0 %v1659
    %v1723 = vpop.f32.mrb[0].mxu0
    %v1724 = vadd.f32 %v1568, %v1723
    %v1725 = vpop.f32.mrb[0].mxu0
    %v1726 = vpop.f32.mrb[0].mxu0
    %v1727 = vadd.f32 %v1573, %v1726
    %v1728 = vpop.f32.mrb[0].mxu0
    %1729 = vmatprep.mubr.bf16.mxu0 0
    %1730 = vmatmul.mubr.bf16.gmra.mrb[0].mxu0 %v1660
    %v1731 = vpop.f32.mrb[0].mxu0
    %v1732 = vadd.f32 %v1578, %v1731
    %v1733 = vpop.f32.mrb[0].mxu0
    %v1734 = vpop.f32.mrb[0].mxu0
    %v1735 = vadd.f32 %v1583, %v1734
    %v1736 = vpop.f32.mrb[0].mxu0
    %1737 = vmatprep.mubr.bf16.mxu0 0
    %1738 = vmatmul.mubr.bf16.gmra.mrb[0].mxu0 %v1661
    %v1739 = vpop.f32.mrb[0].mxu0
    %v1740 = vadd.f32 %v1588, %v1739
    %v1741 = vpop.f32.mrb[0].mxu0
    %v1742 = vpop.f32.mrb[0].mxu0
    %v1743 = vadd.f32 %v1593, %v1742
    %v1744 = vpop.f32.mrb[0].mxu0
    %1745 = vmatprep.mubr.bf16.mxu0 0
    %1746 = vmatmul.mubr.bf16.gmra.mrb[0].mxu0 %v1662
    %v1747 = vpop.f32.mrb[0].mxu0
    %v1748 = vadd.f32 %v1598, %v1747
    %v1749 = vpop.f32.mrb[0].mxu0
    %v1750 = vpop.f32.mrb[0].mxu0
    %v1751 = vadd.f32 %v1603, %v1750
    %v1752 = vpop.f32.mrb[0].mxu0
    %1753 = vmatprep.mubr.bf16.mxu0 0
    %1754 = vmatmul.mubr.bf16.gmra.mrb[0].mxu0 %v1663
    %v1755 = vpop.f32.mrb[0].mxu0
    %v1756 = vadd.f32 %v1608, %v1755
    %v1757 = vpop.f32.mrb[0].mxu0
    %v1758 = vpop.f32.mrb[0].mxu0
    %v1759 = vadd.f32 %v1613, %v1758
    %v1760 = vpop.f32.mrb[0].mxu0
    %1761 = vmatprep.mubr.bf16.mxu0 0
    %1762 = vmatmul.mubr.bf16.gmra.mrb[0].mxu0 %v1664
    %v1763 = vpop.f32.mrb[0].mxu0
    %v1764 = vadd.f32 %v1618, %v1763
    %v1765 = vpop.f32.mrb[0].mxu0
    %v1766 = vpop.f32.mrb[0].mxu0
    %v1767 = vadd.f32 %v1623, %v1766
    %v1768 = vpop.f32.mrb[0].mxu0
    %1769 = vdwg.mxu0
    %v1770 = vmax.f32 %v1708, 0.0
    %v1771 = vmax.f32 %v1711, 0.0
    %v1772 = vmax.f32 %v1716, 0.0
    %v1773 = vmax.f32 %v1719, 0.0
    %v1774 = vmax.f32 %v1724, 0.0
    %v1775 = vmax.f32 %v1727, 0.0
    %v1776 = vmax.f32 %v1732, 0.0
    %v1777 = vmax.f32 %v1735, 0.0
    %v1778 = vmax.f32 %v1740, 0.0
    %v1779 = vmax.f32 %v1743, 0.0
    %v1780 = vmax.f32 %v1748, 0.0
    %v1781 = vmax.f32 %v1751, 0.0
    %v1782 = vmax.f32 %v1756, 0.0
    %v1783 = vmax.f32 %v1759, 0.0
    %v1784 = vmax.f32 %v1764, 0.0
    %v1785 = vmax.f32 %v1767, 0.0
    %v1786 = vld [vmem:[%s6] sm:$0x1]
    %v1787 = vpack.c.bf16 %v1771, %v1770
    %v1788 = vpack.c.bf16 %v1773, %v1772
    %v1789 = vpack.c.bf16 %v1775, %v1774
    %v1790 = vpack.c.bf16 %v1777, %v1776
    %v1791 = vpack.c.bf16 %v1779, %v1778
    %v1792 = vpack.c.bf16 %v1781, %v1780
    %v1793 = vpack.c.bf16 %v1783, %v1782
    %v1794 = vpack.c.bf16 %v1785, %v1784
    %s1795 = scalar_lea.vmem %s7, 256
    %v1796 = vld [vmem:[%s1795] sm:$0xff]
    %1798 = vset.pattern.permute.xlu0 0
    %1799 = vperm.xlu0 %1798, %v1796
    %v1800 = vpop.permute.xlu0 %1799
    %1802 = vmatprep.subr.bf16.mxu0 0
    %1803 = vmatpush1.bf16.msra.mxu0 %v1787
    %1804 = vmatprep.subr.bf16.mxu0 0
    %1805 = vmatpush1.bf16.msra.mxu0 %v1788
    %1806 = vmatprep.subr.bf16.mxu0 0
    %1807 = vmatpush1.bf16.msra.mxu0 %v1789
    %1808 = vmatprep.subr.bf16.mxu0 0
    %1809 = vmatpush1.bf16.msra.mxu0 %v1790
    %1810 = vmatprep.subr.bf16.mxu0 0
    %1811 = vmatpush1.bf16.msra.mxu0 %v1791
    %1812 = vmatprep.subr.bf16.mxu0 0
    %1813 = vmatpush1.bf16.msra.mxu0 %v1792
    %1814 = vmatprep.subr.bf16.mxu0 0
    %1815 = vmatpush1.bf16.msra.mxu0 %v1793
    %1816 = vmatprep.subr.bf16.mxu0 0
    %1817 = vmatpush1.bf16.msra.mxu0 %v1794
    %1818 = vmatprep.subr.bf16.mxu0 0
    %1819 = vmatpush1.bf16.msra.mxu0 0
    %1820 = vmatprep.subr.bf16.mxu0 0
    %1821 = vmatpush1.bf16.msra.mxu0 0
    %1822 = vmatprep.subr.bf16.mxu0 0
    %1823 = vmatpush1.bf16.msra.mxu0 0
    %1824 = vmatprep.subr.bf16.mxu0 0
    %1825 = vmatpush1.bf16.msra.mxu0 0
    %1826 = vmatprep.subr.bf16.mxu0 0
    %1827 = vmatpush1.bf16.msra.mxu0 0
    %1828 = vmatprep.subr.bf16.mxu0 0
    %1829 = vmatpush1.bf16.msra.mxu0 0
    %1830 = vmatprep.subr.bf16.mxu0 0
    %1831 = vmatpush1.bf16.msra.mxu0 0
    %1832 = vmatprep.subr.bf16.mxu0 0
    %1833 = vmatpush1.bf16.msra.mxu0 0
    %1834 = vmatprep.mubr.bf16.mxu0 0
    %1835 = vmatmul.mubr.bf16.gmra.mrb[0].mxu0 %v1786
    %v1836 = vpop.f32.mrb[0].mxu0
    %v1837 = vadd.f32 %v1800, %v1836
    %v1838 = vpop.f32.mrb[0].mxu0
    %v1839 = vpop.f32.mrb[0].mxu0
    %v1840 = vpop.f32.mrb[0].mxu0
    %1841 = vdwg.mxu0
    %vm1842 = vcmask 8192
    %1843 = vst.msk [vmem:[#allocation2] sm:$0x1] %vm1842, %v1837
    // Predicated region
    $region34: #{ink_detector_forward.5} parent=1 // pred_check
      _
    $region35: #{ink_detector_forward.5} parent=1 // pred_check_branch
      %1845 = sbr.rel (0) target = $region37
    $region36: #{ink_detector_forward.5} parent=1 // pred_region
      %s1847 = ssub.s32 16, 16
      %1848 = vsyncadd [#allocation3], %s1847
      %s1850 = sshll.u32 [#allocation2], 4
      %s1851 = int_to_ptr.vmem [resolvable:$true] %s1850
      %1853 = dma.vmem_to_hbm [thread:$0]  %s1851, 16, %s8, [#allocation3]
    $region37: #{ink_detector_forward.5} parent=1 // pred_fallthru
      _
    // Predicated region
    $region38: #{ink_detector_forward.5} parent=1 // pred_check
      _
    $region39: #{ink_detector_forward.5} parent=1 // pred_check_branch
      %1855 = sbr.rel (0) target = $region41
    $region40: #{ink_detector_forward.5} parent=1 // pred_region
      %1856 = dma.done [#allocation3], 16
    $region41: #{ink_detector_forward.5} parent=1 // pred_fallthru
      _
    %1857 = vsyncpa [#allocation3], 1

</llo_original>
